<compile_context>
chip_gen: v6e
topology: v6e:2x2x1
jax: 0.10.0
libtpu: 0.0.40
codegen_flags: <defaults>
</compile_context>

<pallas_src>
import functools

import jax
import jax.numpy as jnp
from jax.experimental import pallas as pl
from jax.experimental.pallas import tpu as pltpu

LN_EPS = 1e-5


def _gelu_exact(x):
    # PyTorch nn.GELU default (erf-based, not tanh approximation).
    return 0.5 * x * (1.0 + jax.lax.erf(x * (1.0 / jnp.sqrt(2.0).astype(x.dtype))))


def _layernorm(x, g, b):
    mu = jnp.mean(x, axis=-1, keepdims=True)
    var = jnp.mean((x - mu) * (x - mu), axis=-1, keepdims=True)
    return (x - mu) * jax.lax.rsqrt(var + LN_EPS) * g + b


def block_kernel(num_heads, lora_r,
                 x_ref,
                 ln1g_ref, ln1b_ref,
                 w_ext_ref, b_cat_ref,
                 wo_ref, bo_ref,
                 ln2g_ref, ln2b_ref,
                 w1_ref, b1_ref, w2_ref, b2_ref,
                 o_ref,
                 attn_scr):
    x = x_ref[0]                              # (N, C) f32
    N, C = x.shape
    H = num_heads
    D = C // H
    bf16 = jnp.bfloat16

    # Small per-row params: read each ref exactly once per grid step.
    ln1g = ln1g_ref[...]
    ln1b = ln1b_ref[...]
    ln2g = ln2g_ref[...]
    ln2b = ln2b_ref[...]
    bo = bo_ref[...]
    b1 = b1_ref[...]
    b2 = b2_ref[...]

    # ---- Attention branch --------------------------------------------------
    xn = _layernorm(x, ln1g, ln1b)            # f32
    xn_bf = xn.astype(bf16)

    # One fused MXU pass: [q*scale | k | v | lora_dn_q | lora_dn_v]  (N, 3C+2r)
    # (softmax scale pre-folded into the q columns of w_ext on the host).
    qkv_ext = jnp.dot(xn_bf, w_ext_ref[...], preferred_element_type=jnp.float32)

    # LoRA up-projection (2r, 2C): [dq*scale | dv], added into the 128-aligned
    # q / v column blocks of the qkv slab.
    lora_up = jnp.dot(qkv_ext[:, 3 * C:].astype(bf16), b_cat_ref[...],
                      preferred_element_type=jnp.float32)       # (N, 2C)
    q_f = qkv_ext[:, :C] + lora_up[:, :C]      # already softmax-scaled
    k_f = qkv_ext[:, C:2 * C]
    v_f = qkv_ext[:, 2 * C:3 * C] + lora_up[:, C:]

    # Heads-leading (H, N, D) layout built once, then one heads-batched einsum
    # pair for QK^T / P@V replaces the per-head Python matmul loop.
    # TODO(synk): at production C (multiple of 128) do the head split with
    # pltpu.einshape instead of static lane slices.
    qh = jnp.stack([q_f[:, h * D:(h + 1) * D] for h in range(H)], axis=0).astype(bf16)
    kh = jnp.stack([k_f[:, h * D:(h + 1) * D] for h in range(H)], axis=0).astype(bf16)
    vh = jnp.stack([v_f[:, h * D:(h + 1) * D] for h in range(H)], axis=0).astype(bf16)

    s = jnp.einsum("hnd,hmd->hnm", qh, kh,
                   preferred_element_type=jnp.float32)          # (H, N, N) f32
    s = s - jnp.max(s, axis=-1, keepdims=True)
    p = jnp.exp(s)
    # Exact reciprocal on an (H, N, 1) sum: negligible cost, tighter accuracy.
    inv = pl.reciprocal(jnp.sum(p, axis=-1, keepdims=True), approx=False)
    o = jnp.einsum("hnm,hmd->hnd", p.astype(bf16), vh,
                   preferred_element_type=jnp.float32) * inv     # (H, N, D) f32
    o_bf = o.astype(bf16)
    for h in range(H):                        # lay heads back out as (N, C) bf16
        attn_scr[:, h * D:(h + 1) * D] = o_bf[h]

    attn_out = jnp.dot(attn_scr[...], wo_ref[...],
                       preferred_element_type=jnp.float32) + bo
    x1 = x + attn_out                         # residual (drop_path == identity)

    # ---- MLP branch (SparseMlp with kw_percent_on=1 -> plain GELU MLP) -----
    x2n = _layernorm(x1, ln2g, ln2b)
    hdn = jnp.dot(x2n.astype(bf16), w1_ref[...],
                  preferred_element_type=jnp.float32) + b1
    hdn = _gelu_exact(hdn)
    mlp = jnp.dot(hdn.astype(bf16), w2_ref[...],
                  preferred_element_type=jnp.float32) + b2

    o_ref[0] = (x1 + mlp).astype(o_ref.dtype)


def pack_kernel_params(params, lora_r, num_heads):
    """Host-side packing: bf16 cast, LoRA fusion into QKV, softmax-scale fold."""
    (ln1g, ln1b, wqkv_t, aq_t, bq_t, av_t, bv_t, wo_t, bo,
     ln2g, ln2b, w1_t, b1, w2_t, b2) = params
    C = wqkv_t.shape[0]
    r = lora_r
    scale = jnp.float32((C // num_heads) ** -0.5)
    bf16 = jnp.bfloat16

    # Extended QKV weight: [Wq*scale | Wk | Wv | Aq | Av]  -> (C, 3C + 2r).
    w_ext = jnp.concatenate(
        [wqkv_t[:, :C] * scale, wqkv_t[:, C:], aq_t, av_t], axis=1)

    # LoRA up weight, block structured (2r, 2C): rows 0:r feed the q columns
    # (scale folded), rows r:2r feed the v columns.
    b_cat = jnp.zeros((2 * r, 2 * C), jnp.float32)
    b_cat = b_cat.at[:r, :C].set(bq_t * scale)
    b_cat = b_cat.at[r:, C:].set(bv_t)

    return (ln1g, ln1b,
            w_ext.astype(bf16), b_cat.astype(bf16),
            wo_t.astype(bf16), bo,
            ln2g, ln2b,
            w1_t.astype(bf16), b1,
            w2_t.astype(bf16), b2)


def _pick_vmem_limit_bytes():
    """48 MiB on v7x (64 MiB physical per TC); 96 MiB on v5e/v6e (128 MiB)."""
    mib = 1024 * 1024
    try:
        cap = int(getattr(pltpu.get_tpu_info(), "vmem_capacity_bytes", 64 * mib))
    except Exception:  # query unavailable -> conservative v7x-safe default
        cap = 64 * mib
    return 96 * mib if cap >= 128 * mib else 48 * mib


def vit_block_pallas(x, kparams, num_heads, lora_r):
    B, N, C = x.shape
    kparams = list(kparams)
    hidden = kparams[8].shape[1]              # mlp hidden dim (from w1)
    r2 = 2 * lora_r

    # x / out are double-buffered across the batch grid; constant-index weight
    # and bias blocks are single-buffered (pl.Buffered(1)) to free VMEM.
    in_specs = [pl.BlockSpec((1, N, C), lambda b: (b, 0, 0))]
    for p in kparams:
        in_specs.append(
            pl.BlockSpec(p.shape, lambda b, _nd=p.ndim: (0,) * _nd,
                         pipeline_mode=pl.Buffered(1)))

    # Advisory cost estimate for XLA scheduling of the custom call.
    flops = B * (2 * N * C * (3 * C + r2)      # fused qkv + LoRA-down
                 + 2 * N * r2 * 2 * C          # LoRA-up
                 + 4 * N * N * C               # qk^T + p@v (all heads)
                 + 2 * N * C * C               # output projection
                 + 4 * N * C * hidden)         # mlp fc1 + fc2
    transcendentals = B * (num_heads * N * N   # softmax exp
                           + N * hidden        # GELU erf
                           + 2 * N             # layernorm rsqrt
                           + num_heads * N)    # softmax reciprocal
    bytes_accessed = (2 * int(x.size) * x.dtype.itemsize
                      + sum(int(p.size) * p.dtype.itemsize for p in kparams))

    return pl.pallas_call(
        functools.partial(block_kernel, num_heads, lora_r),
        out_shape=jax.ShapeDtypeStruct((B, N, C), x.dtype),
        grid=(B,),
        in_specs=in_specs,
        out_specs=pl.BlockSpec((1, N, C), lambda b: (b, 0, 0)),
        scratch_shapes=[pltpu.VMEM((N, C), jnp.bfloat16)],
        compiler_params=pltpu.CompilerParams(
            dimension_semantics=("parallel",),
            vmem_limit_bytes=_pick_vmem_limit_bytes()),
        cost_estimate=pl.CostEstimate(
            flops=int(flops),
            transcendentals=int(transcendentals),
            bytes_accessed=int(bytes_accessed)),
    )(x, *kparams)


def vit_block_reference(x, params, num_heads):
    """Pure-JAX f32 reference of the PyTorch module forward."""
    (ln1g, ln1b, wqkv_t, aq_t, bq_t, av_t, bv_t, wo_t, bo,
     ln2g, ln2b, w1_t, b1, w2_t, b2) = params
    B, N, C = x.shape
    D = C // num_heads
    scale = D ** -0.5

    def ln(v, g, b):
        mu = jnp.mean(v, axis=-1, keepdims=True)
        var = jnp.mean((v - mu) ** 2, axis=-1, keepdims=True)
        return (v - mu) / jnp.sqrt(var + LN_EPS) * g + b

    xn = ln(x, ln1g, ln1b)
    qkv = xn @ wqkv_t
    q, k, v = qkv[..., :C], qkv[..., C:2 * C], qkv[..., 2 * C:]
    q = q + (xn @ aq_t) @ bq_t
    v = v + (xn @ av_t) @ bv_t
    qh = q.reshape(B, N, num_heads, D).transpose(0, 2, 1, 3)
    kh = k.reshape(B, N, num_heads, D).transpose(0, 2, 1, 3)
    vh = v.reshape(B, N, num_heads, D).transpose(0, 2, 1, 3)
    attn = jnp.einsum("bhnd,bhmd->bhnm", qh, kh) * scale
    attn = jax.nn.softmax(attn, axis=-1)
    o = jnp.einsum("bhnm,bhmd->bhnd", attn, vh)
    o = o.transpose(0, 2, 1, 3).reshape(B, N, C)
    x1 = x + (o @ wo_t + bo)
    x2n = ln(x1, ln2g, ln2b)
    h = x2n @ w1_t + b1
    h = 0.5 * h * (1.0 + jax.lax.erf(h / jnp.sqrt(2.0)))
    return x1 + (h @ w2_t + b2)


def make_params(key, dim, num_heads, mlp_ratio, lora_r):
    hidden = int(dim * mlp_ratio)
    keys = jax.random.split(key, 14)
    std = 0.02
    ln1g = 1.0 + 0.1 * jax.random.normal(keys[0], (1, dim), jnp.float32)
    ln1b = 0.1 * jax.random.normal(keys[1], (1, dim), jnp.float32)
    wqkv_t = std * jax.random.normal(keys[2], (dim, 3 * dim), jnp.float32)
    aq_t = std * jax.random.normal(keys[3], (dim, lora_r), jnp.float32)
    # LoRA B is zero-initialized in the module; use small nonzero values here
    # so the fused LoRA path is actually validated numerically (the forward
    # semantics are identical for any value of B).
    bq_t = std * jax.random.normal(keys[4], (lora_r, dim), jnp.float32)
    av_t = std * jax.random.normal(keys[5], (dim, lora_r), jnp.float32)
    bv_t = std * jax.random.normal(keys[6], (lora_r, dim), jnp.float32)
    wo_t = std * jax.random.normal(keys[7], (dim, dim), jnp.float32)
    bo = 0.01 * jax.random.normal(keys[8], (1, dim), jnp.float32)
    ln2g = 1.0 + 0.1 * jax.random.normal(keys[9], (1, dim), jnp.float32)
    ln2b = 0.1 * jax.random.normal(keys[10], (1, dim), jnp.float32)
    w1_t = std * jax.random.normal(keys[11], (dim, hidden), jnp.float32)
    b1 = 0.01 * jax.random.normal(keys[12], (1, hidden), jnp.float32)
    w2_t = std * jax.random.normal(keys[13], (hidden, dim), jnp.float32)
    b2 = jnp.zeros((1, dim), jnp.float32)
    return (ln1g, ln1b, wqkv_t, aq_t, bq_t, av_t, bv_t, wo_t, bo,
            ln2g, ln2b, w1_t, b1, w2_t, b2)


if __name__ == "__main__":
    # Small demo shapes. NOTE: tune/benchmark at production ViT sizes
    # (C=768, N>=197, H=12); conclusions at these tiny shapes do not transfer.
    B, N, dim = 4, 16, 64
    num_heads = 4
    mlp_ratio = 4.0
    lora_r = 8

    key = jax.random.PRNGKey(0)
    kx, kp = jax.random.split(key)
    x = jax.random.normal(kx, (B, N, dim), jnp.float32)
    params = make_params(kp, dim, num_heads, mlp_ratio, lora_r)
    kparams = pack_kernel_params(params, lora_r, num_heads)

    out = jax.block_until_ready(vit_block_pallas(x, kparams, num_heads, lora_r))
    ref = vit_block_reference(x, params, num_heads)

    assert out.shape == (B, N, dim)
    max_err = float(jnp.max(jnp.abs(out - ref)))
    # bf16 matmul operands vs f32 reference -> loosened tolerance.
    assert jnp.allclose(out, ref, atol=2e-2, rtol=2e-2), max_err

    print("KERNEL_OK")
</pallas_src>

<mosaic_0001>
module attributes {stable_mosaic.version = 11 : i64} {
  func.func @block_kernel(%arg0: i32, %arg1: memref<1x16x64xf32, #tpu.memory_space<vmem>>, %arg2: memref<1x64xf32, #tpu.memory_space<vmem>>, %arg3: memref<1x64xf32, #tpu.memory_space<vmem>>, %arg4: memref<64x208xbf16, #tpu.memory_space<vmem>>, %arg5: memref<16x128xbf16, #tpu.memory_space<vmem>>, %arg6: memref<64x64xbf16, #tpu.memory_space<vmem>>, %arg7: memref<1x64xf32, #tpu.memory_space<vmem>>, %arg8: memref<1x64xf32, #tpu.memory_space<vmem>>, %arg9: memref<1x64xf32, #tpu.memory_space<vmem>>, %arg10: memref<64x256xbf16, #tpu.memory_space<vmem>>, %arg11: memref<1x256xf32, #tpu.memory_space<vmem>>, %arg12: memref<256x64xbf16, #tpu.memory_space<vmem>>, %arg13: memref<1x64xf32, #tpu.memory_space<vmem>>, %arg14: memref<1x16x64xf32, #tpu.memory_space<vmem>>, %arg15: memref<16x64xbf16, #tpu.memory_space<vmem>>) attributes {dimension_semantics = [#tpu.dimension_semantics<parallel>], iteration_bounds = array<i64: 4>, scalar_prefetch = 0 : i64, scratch_operands = 1 : i64, tpu.core_type = #tpu.core_type<tc>, window_params = [{transform_indices = @transform_0, window_bounds = array<i64: 1, 16, 64>}, {pipeline_mode = #tpu.pipeline_mode<synchronous>, transform_indices = @transform_1, window_bounds = array<i64: 1, 64>}, {pipeline_mode = #tpu.pipeline_mode<synchronous>, transform_indices = @transform_2, window_bounds = array<i64: 1, 64>}, {pipeline_mode = #tpu.pipeline_mode<synchronous>, transform_indices = @transform_3, window_bounds = array<i64: 64, 208>}, {pipeline_mode = #tpu.pipeline_mode<synchronous>, transform_indices = @transform_4, window_bounds = array<i64: 16, 128>}, {pipeline_mode = #tpu.pipeline_mode<synchronous>, transform_indices = @transform_5, window_bounds = array<i64: 64, 64>}, {pipeline_mode = #tpu.pipeline_mode<synchronous>, transform_indices = @transform_6, window_bounds = array<i64: 1, 64>}, {pipeline_mode = #tpu.pipeline_mode<synchronous>, transform_indices = @transform_7, window_bounds = array<i64: 1, 64>}, {pipeline_mode = #tpu.pipeline_mode<synchronous>, transform_indices = @transform_8, window_bounds = array<i64: 1, 64>}, {pipeline_mode = #tpu.pipeline_mode<synchronous>, transform_indices = @transform_9, window_bounds = array<i64: 64, 256>}, {pipeline_mode = #tpu.pipeline_mode<synchronous>, transform_indices = @transform_10, window_bounds = array<i64: 1, 256>}, {pipeline_mode = #tpu.pipeline_mode<synchronous>, transform_indices = @transform_11, window_bounds = array<i64: 256, 64>}, {pipeline_mode = #tpu.pipeline_mode<synchronous>, transform_indices = @transform_12, window_bounds = array<i64: 1, 64>}, {transform_indices = @transform_13, window_bounds = array<i64: 1, 16, 64>}]} {
    %c0 = arith.constant 0 : index
    %c0_0 = arith.constant 0 : index
    %c0_1 = arith.constant 0 : index
    %0 = vector.load %arg1[%c0, %c0_0, %c0_1] : memref<1x16x64xf32, #tpu.memory_space<vmem>>, vector<1x16x64xf32>
    %1 = vector.shape_cast %0 : vector<1x16x64xf32> to vector<16x64xf32>
    %c0_2 = arith.constant 0 : index
    %c0_3 = arith.constant 0 : index
    %2 = vector.load %arg2[%c0_2, %c0_3] : memref<1x64xf32, #tpu.memory_space<vmem>>, vector<1x64xf32>
    %c0_4 = arith.constant 0 : index
    %c0_5 = arith.constant 0 : index
    %3 = vector.load %arg3[%c0_4, %c0_5] : memref<1x64xf32, #tpu.memory_space<vmem>>, vector<1x64xf32>
    %c0_6 = arith.constant 0 : index
    %c0_7 = arith.constant 0 : index
    %4 = vector.load %arg8[%c0_6, %c0_7] : memref<1x64xf32, #tpu.memory_space<vmem>>, vector<1x64xf32>
    %c0_8 = arith.constant 0 : index
    %c0_9 = arith.constant 0 : index
    %5 = vector.load %arg9[%c0_8, %c0_9] : memref<1x64xf32, #tpu.memory_space<vmem>>, vector<1x64xf32>
    %c0_10 = arith.constant 0 : index
    %c0_11 = arith.constant 0 : index
    %6 = vector.load %arg7[%c0_10, %c0_11] : memref<1x64xf32, #tpu.memory_space<vmem>>, vector<1x64xf32>
    %c0_12 = arith.constant 0 : index
    %c0_13 = arith.constant 0 : index
    %7 = vector.load %arg11[%c0_12, %c0_13] : memref<1x256xf32, #tpu.memory_space<vmem>>, vector<1x256xf32>
    %c0_14 = arith.constant 0 : index
    %c0_15 = arith.constant 0 : index
    %8 = vector.load %arg13[%c0_14, %c0_15] : memref<1x64xf32, #tpu.memory_space<vmem>>, vector<1x64xf32>
    %cst = arith.constant dense<0.000000e+00> : vector<16xf32>
    %9 = vector.multi_reduction <add>, %1, %cst [1] : vector<16x64xf32> to vector<16xf32>
    %10 = vector.shape_cast %9 : vector<16xf32> to vector<16x1xf32>
    %cst_16 = arith.constant 6.400000e+01 : f32
    %11 = vector.broadcast %cst_16 : f32 to vector<16x1xf32>
    %12 = arith.divf %10, %11 : vector<16x1xf32>
    %13 = vector.broadcast %12 : vector<16x1xf32> to vector<16x64xf32>
    %14 = arith.subf %1, %13 : vector<16x64xf32>
    %15 = vector.broadcast %12 : vector<16x1xf32> to vector<16x64xf32>
    %16 = arith.subf %1, %15 : vector<16x64xf32>
    %17 = arith.mulf %14, %16 : vector<16x64xf32>
    %cst_17 = arith.constant dense<0.000000e+00> : vector<16xf32>
    %18 = vector.multi_reduction <add>, %17, %cst_17 [1] : vector<16x64xf32> to vector<16xf32>
    %19 = vector.shape_cast %18 : vector<16xf32> to vector<16x1xf32>
    %cst_18 = arith.constant 6.400000e+01 : f32
    %20 = vector.broadcast %cst_18 : f32 to vector<16x1xf32>
    %21 = arith.divf %19, %20 : vector<16x1xf32>
    %22 = vector.broadcast %12 : vector<16x1xf32> to vector<16x64xf32>
    %23 = arith.subf %1, %22 : vector<16x64xf32>
    %cst_19 = arith.constant 9.99999974E-6 : f32
    %24 = vector.broadcast %cst_19 : f32 to vector<16x1xf32>
    %25 = arith.addf %21, %24 : vector<16x1xf32>
    %26 = math.rsqrt %25 : vector<16x1xf32>
    %27 = vector.broadcast %26 : vector<16x1xf32> to vector<16x64xf32>
    %28 = arith.mulf %23, %27 : vector<16x64xf32>
    %29 = vector.broadcast %2 : vector<1x64xf32> to vector<16x64xf32>
    %30 = arith.mulf %28, %29 : vector<16x64xf32>
    %31 = vector.broadcast %3 : vector<1x64xf32> to vector<16x64xf32>
    %32 = arith.addf %30, %31 : vector<16x64xf32>
    %33 = arith.truncf %32 : vector<16x64xf32> to vector<16x64xbf16>
    %c0_20 = arith.constant 0 : index
    %c0_21 = arith.constant 0 : index
    %34 = vector.load %arg4[%c0_20, %c0_21] : memref<64x208xbf16, #tpu.memory_space<vmem>>, vector<64x208xbf16>
    %cst_22 = arith.constant dense<0.000000e+00> : vector<16x208xf32>
    %35 = tpu.matmul %33, %34, %cst_22 {dimension_numbers = #tpu.dot_dimension_numbers<[1], [0], [0], [1], [0, 0, 1, 1], [], []>} : vector<16x64xbf16>, vector<64x208xbf16>, vector<16x208xf32> -> vector<16x208xf32>
    %36 = vector.extract_strided_slice %35 {offsets = [0, 192], sizes = [16, 16], strides = [1, 1]} : vector<16x208xf32> to vector<16x16xf32>
    %37 = arith.truncf %36 : vector<16x16xf32> to vector<16x16xbf16>
    %c0_23 = arith.constant 0 : index
    %c0_24 = arith.constant 0 : index
    %38 = vector.load %arg5[%c0_23, %c0_24] : memref<16x128xbf16, #tpu.memory_space<vmem>>, vector<16x128xbf16>
    %cst_25 = arith.constant dense<0.000000e+00> : vector<16x128xf32>
    %39 = tpu.matmul %37, %38, %cst_25 {dimension_numbers = #tpu.dot_dimension_numbers<[1], [0], [0], [1], [0, 0, 1, 1], [], []>} : vector<16x16xbf16>, vector<16x128xbf16>, vector<16x128xf32> -> vector<16x128xf32>
    %40 = vector.extract_strided_slice %35 {offsets = [0, 0], sizes = [16, 64], strides = [1, 1]} : vector<16x208xf32> to vector<16x64xf32>
    %41 = vector.extract_strided_slice %39 {offsets = [0, 0], sizes = [16, 64], strides = [1, 1]} : vector<16x128xf32> to vector<16x64xf32>
    %42 = arith.addf %40, %41 : vector<16x64xf32>
    %43 = vector.extract_strided_slice %35 {offsets = [0, 64], sizes = [16, 64], strides = [1, 1]} : vector<16x208xf32> to vector<16x64xf32>
    %44 = vector.extract_strided_slice %35 {offsets = [0, 128], sizes = [16, 64], strides = [1, 1]} : vector<16x208xf32> to vector<16x64xf32>
    %45 = vector.extract_strided_slice %39 {offsets = [0, 64], sizes = [16, 64], strides = [1, 1]} : vector<16x128xf32> to vector<16x64xf32>
    %46 = arith.addf %44, %45 : vector<16x64xf32>
    %47 = vector.extract_strided_slice %42 {offsets = [0, 0], sizes = [16, 16], strides = [1, 1]} : vector<16x64xf32> to vector<16x16xf32>
    %48 = vector.extract_strided_slice %42 {offsets = [0, 16], sizes = [16, 16], strides = [1, 1]} : vector<16x64xf32> to vector<16x16xf32>
    %49 = vector.extract_strided_slice %42 {offsets = [0, 32], sizes = [16, 16], strides = [1, 1]} : vector<16x64xf32> to vector<16x16xf32>
    %50 = vector.extract_strided_slice %42 {offsets = [0, 48], sizes = [16, 16], strides = [1, 1]} : vector<16x64xf32> to vector<16x16xf32>
    %51 = vector.shape_cast %47 : vector<16x16xf32> to vector<1x16x16xf32>
    %52 = vector.shape_cast %48 : vector<16x16xf32> to vector<1x16x16xf32>
    %53 = vector.shape_cast %49 : vector<16x16xf32> to vector<1x16x16xf32>
    %54 = vector.shape_cast %50 : vector<16x16xf32> to vector<1x16x16xf32>
    %55 = tpu.concatenate %51, %52, %53, %54 in 0 : vector<1x16x16xf32>, vector<1x16x16xf32>, vector<1x16x16xf32>, vector<1x16x16xf32> -> vector<4x16x16xf32>
    %56 = arith.truncf %55 : vector<4x16x16xf32> to vector<4x16x16xbf16>
    %57 = vector.extract_strided_slice %43 {offsets = [0, 0], sizes = [16, 16], strides = [1, 1]} : vector<16x64xf32> to vector<16x16xf32>
    %58 = vector.extract_strided_slice %43 {offsets = [0, 16], sizes = [16, 16], strides = [1, 1]} : vector<16x64xf32> to vector<16x16xf32>
    %59 = vector.extract_strided_slice %43 {offsets = [0, 32], sizes = [16, 16], strides = [1, 1]} : vector<16x64xf32> to vector<16x16xf32>
    %60 = vector.extract_strided_slice %43 {offsets = [0, 48], sizes = [16, 16], strides = [1, 1]} : vector<16x64xf32> to vector<16x16xf32>
    %61 = vector.shape_cast %57 : vector<16x16xf32> to vector<1x16x16xf32>
    %62 = vector.shape_cast %58 : vector<16x16xf32> to vector<1x16x16xf32>
    %63 = vector.shape_cast %59 : vector<16x16xf32> to vector<1x16x16xf32>
    %64 = vector.shape_cast %60 : vector<16x16xf32> to vector<1x16x16xf32>
    %65 = tpu.concatenate %61, %62, %63, %64 in 0 : vector<1x16x16xf32>, vector<1x16x16xf32>, vector<1x16x16xf32>, vector<1x16x16xf32> -> vector<4x16x16xf32>
    %66 = arith.truncf %65 : vector<4x16x16xf32> to vector<4x16x16xbf16>
    %67 = vector.extract_strided_slice %46 {offsets = [0, 0], sizes = [16, 16], strides = [1, 1]} : vector<16x64xf32> to vector<16x16xf32>
    %68 = vector.extract_strided_slice %46 {offsets = [0, 16], sizes = [16, 16], strides = [1, 1]} : vector<16x64xf32> to vector<16x16xf32>
    %69 = vector.extract_strided_slice %46 {offsets = [0, 32], sizes = [16, 16], strides = [1, 1]} : vector<16x64xf32> to vector<16x16xf32>
    %70 = vector.extract_strided_slice %46 {offsets = [0, 48], sizes = [16, 16], strides = [1, 1]} : vector<16x64xf32> to vector<16x16xf32>
    %71 = vector.shape_cast %67 : vector<16x16xf32> to vector<1x16x16xf32>
    %72 = vector.shape_cast %68 : vector<16x16xf32> to vector<1x16x16xf32>
    %73 = vector.shape_cast %69 : vector<16x16xf32> to vector<1x16x16xf32>
    %74 = vector.shape_cast %70 : vector<16x16xf32> to vector<1x16x16xf32>
    %75 = tpu.concatenate %71, %72, %73, %74 in 0 : vector<1x16x16xf32>, vector<1x16x16xf32>, vector<1x16x16xf32>, vector<1x16x16xf32> -> vector<4x16x16xf32>
    %76 = arith.truncf %75 : vector<4x16x16xf32> to vector<4x16x16xbf16>
    "tpu.trace_start"() <{level = 10 : i32, message = "hnd,hmd->hnm"}> : () -> ()
    %cst_26 = arith.constant dense<0.000000e+00> : vector<4x16x16xf32>
    %77 = tpu.matmul %56, %66, %cst_26 {dimension_numbers = #tpu.dot_dimension_numbers<[2], [2], [1], [1], [0, 0, 0, 1, 1, 1], [0], [0]>} : vector<4x16x16xbf16>, vector<4x16x16xbf16>, vector<4x16x16xf32> -> vector<4x16x16xf32>
    "tpu.trace_stop"() : () -> ()
    %cst_27 = arith.constant dense<0xFF800000> : vector<4x16xf32>
    %78 = vector.multi_reduction <maximumf>, %77, %cst_27 [2] : vector<4x16x16xf32> to vector<4x16xf32>
    %79 = vector.shape_cast %78 : vector<4x16xf32> to vector<4x16x1xf32>
    %80 = vector.broadcast %79 : vector<4x16x1xf32> to vector<4x16x16xf32>
    %81 = arith.subf %77, %80 : vector<4x16x16xf32>
    %82 = math.exp %81 : vector<4x16x16xf32>
    %cst_28 = arith.constant dense<0.000000e+00> : vector<4x16xf32>
    %83 = vector.multi_reduction <add>, %82, %cst_28 [2] : vector<4x16x16xf32> to vector<4x16xf32>
    %84 = vector.shape_cast %83 : vector<4x16xf32> to vector<4x16x1xf32>
    %85 = tpu.reciprocal %84 : vector<4x16x1xf32> -> vector<4x16x1xf32>
    %86 = arith.truncf %82 : vector<4x16x16xf32> to vector<4x16x16xbf16>
    "tpu.trace_start"() <{level = 10 : i32, message = "hnm,hmd->hnd"}> : () -> ()
    %cst_29 = arith.constant dense<0.000000e+00> : vector<4x16x16xf32>
    %87 = tpu.matmul %86, %76, %cst_29 {dimension_numbers = #tpu.dot_dimension_numbers<[2], [1], [1], [2], [0, 0, 0, 1, 1, 2], [0], [0]>} : vector<4x16x16xbf16>, vector<4x16x16xbf16>, vector<4x16x16xf32> -> vector<4x16x16xf32>
    "tpu.trace_stop"() : () -> ()
    %88 = vector.broadcast %85 : vector<4x16x1xf32> to vector<4x16x16xf32>
    %89 = arith.mulf %87, %88 : vector<4x16x16xf32>
    %90 = arith.truncf %89 : vector<4x16x16xf32> to vector<4x16x16xbf16>
    %91 = vector.extract_strided_slice %90 {offsets = [0, 0, 0], sizes = [1, 16, 16], strides = [1, 1, 1]} : vector<4x16x16xbf16> to vector<1x16x16xbf16>
    %92 = vector.shape_cast %91 : vector<1x16x16xbf16> to vector<16x16xbf16>
    %c0_30 = arith.constant 0 : index
    %c0_31 = arith.constant 0 : index
    %93 = vector.load %arg15[%c0_30, %c0_31] : memref<16x64xbf16, #tpu.memory_space<vmem>>, vector<16x16xbf16>
    tpu.vector_store %arg15[%c0_30, %c0_31], %92 {strides = array<i32>} : memref<16x64xbf16, #tpu.memory_space<vmem>>, vector<16x16xbf16>,
    %94 = vector.extract_strided_slice %90 {offsets = [1, 0, 0], sizes = [1, 16, 16], strides = [1, 1, 1]} : vector<4x16x16xbf16> to vector<1x16x16xbf16>
    %95 = vector.shape_cast %94 : vector<1x16x16xbf16> to vector<16x16xbf16>
    %c0_32 = arith.constant 0 : index
    %c16 = arith.constant 16 : index
    %96 = vector.load %arg15[%c0_32, %c16] : memref<16x64xbf16, #tpu.memory_space<vmem>>, vector<16x16xbf16>
    tpu.vector_store %arg15[%c0_32, %c16], %95 {strides = array<i32>} : memref<16x64xbf16, #tpu.memory_space<vmem>>, vector<16x16xbf16>,
    %97 = vector.extract_strided_slice %90 {offsets = [2, 0, 0], sizes = [1, 16, 16], strides = [1, 1, 1]} : vector<4x16x16xbf16> to vector<1x16x16xbf16>
    %98 = vector.shape_cast %97 : vector<1x16x16xbf16> to vector<16x16xbf16>
    %c0_33 = arith.constant 0 : index
    %c32 = arith.constant 32 : index
    %99 = vector.load %arg15[%c0_33, %c32] : memref<16x64xbf16, #tpu.memory_space<vmem>>, vector<16x16xbf16>
    tpu.vector_store %arg15[%c0_33, %c32], %98 {strides = array<i32>} : memref<16x64xbf16, #tpu.memory_space<vmem>>, vector<16x16xbf16>,
    %100 = vector.extract_strided_slice %90 {offsets = [3, 0, 0], sizes = [1, 16, 16], strides = [1, 1, 1]} : vector<4x16x16xbf16> to vector<1x16x16xbf16>
    %101 = vector.shape_cast %100 : vector<1x16x16xbf16> to vector<16x16xbf16>
    %c0_34 = arith.constant 0 : index
    %c48 = arith.constant 48 : index
    %102 = vector.load %arg15[%c0_34, %c48] : memref<16x64xbf16, #tpu.memory_space<vmem>>, vector<16x16xbf16>
    tpu.vector_store %arg15[%c0_34, %c48], %101 {strides = array<i32>} : memref<16x64xbf16, #tpu.memory_space<vmem>>, vector<16x16xbf16>,
    %c0_35 = arith.constant 0 : index
    %c0_36 = arith.constant 0 : index
    %103 = vector.load %arg15[%c0_35, %c0_36] : memref<16x64xbf16, #tpu.memory_space<vmem>>, vector<16x64xbf16>
    %c0_37 = arith.constant 0 : index
    %c0_38 = arith.constant 0 : index
    %104 = vector.load %arg6[%c0_37, %c0_38] : memref<64x64xbf16, #tpu.memory_space<vmem>>, vector<64x64xbf16>
    %cst_39 = arith.constant dense<0.000000e+00> : vector<16x64xf32>
    %105 = tpu.matmul %103, %104, %cst_39 {dimension_numbers = #tpu.dot_dimension_numbers<[1], [0], [0], [1], [0, 0, 1, 1], [], []>} : vector<16x64xbf16>, vector<64x64xbf16>, vector<16x64xf32> -> vector<16x64xf32>
    %106 = vector.broadcast %6 : vector<1x64xf32> to vector<16x64xf32>
    %107 = arith.addf %105, %106 : vector<16x64xf32>
    %108 = arith.addf %1, %107 : vector<16x64xf32>
    %cst_40 = arith.constant dense<0.000000e+00> : vector<16xf32>
    %109 = vector.multi_reduction <add>, %108, %cst_40 [1] : vector<16x64xf32> to vector<16xf32>
    %110 = vector.shape_cast %109 : vector<16xf32> to vector<16x1xf32>
    %cst_41 = arith.constant 6.400000e+01 : f32
    %111 = vector.broadcast %cst_41 : f32 to vector<16x1xf32>
    %112 = arith.divf %110, %111 : vector<16x1xf32>
    %113 = vector.broadcast %112 : vector<16x1xf32> to vector<16x64xf32>
    %114 = arith.subf %108, %113 : vector<16x64xf32>
    %115 = vector.broadcast %112 : vector<16x1xf32> to vector<16x64xf32>
    %116 = arith.subf %108, %115 : vector<16x64xf32>
    %117 = arith.mulf %114, %116 : vector<16x64xf32>
    %cst_42 = arith.constant dense<0.000000e+00> : vector<16xf32>
    %118 = vector.multi_reduction <add>, %117, %cst_42 [1] : vector<16x64xf32> to vector<16xf32>
    %119 = vector.shape_cast %118 : vector<16xf32> to vector<16x1xf32>
    %cst_43 = arith.constant 6.400000e+01 : f32
    %120 = vector.broadcast %cst_43 : f32 to vector<16x1xf32>
    %121 = arith.divf %119, %120 : vector<16x1xf32>
    %122 = vector.broadcast %112 : vector<16x1xf32> to vector<16x64xf32>
    %123 = arith.subf %108, %122 : vector<16x64xf32>
    %cst_44 = arith.constant 9.99999974E-6 : f32
    %124 = vector.broadcast %cst_44 : f32 to vector<16x1xf32>
    %125 = arith.addf %121, %124 : vector<16x1xf32>
    %126 = math.rsqrt %125 : vector<16x1xf32>
    %127 = vector.broadcast %126 : vector<16x1xf32> to vector<16x64xf32>
    %128 = arith.mulf %123, %127 : vector<16x64xf32>
    %129 = vector.broadcast %4 : vector<1x64xf32> to vector<16x64xf32>
    %130 = arith.mulf %128, %129 : vector<16x64xf32>
    %131 = vector.broadcast %5 : vector<1x64xf32> to vector<16x64xf32>
    %132 = arith.addf %130, %131 : vector<16x64xf32>
    %133 = arith.truncf %132 : vector<16x64xf32> to vector<16x64xbf16>
    %c0_45 = arith.constant 0 : index
    %c0_46 = arith.constant 0 : index
    %134 = vector.load %arg10[%c0_45, %c0_46] : memref<64x256xbf16, #tpu.memory_space<vmem>>, vector<64x256xbf16>
    %cst_47 = arith.constant dense<0.000000e+00> : vector<16x256xf32>
    %135 = tpu.matmul %133, %134, %cst_47 {dimension_numbers = #tpu.dot_dimension_numbers<[1], [0], [0], [1], [0, 0, 1, 1], [], []>} : vector<16x64xbf16>, vector<64x256xbf16>, vector<16x256xf32> -> vector<16x256xf32>
    %136 = vector.broadcast %7 : vector<1x256xf32> to vector<16x256xf32>
    %137 = arith.addf %135, %136 : vector<16x256xf32>
    %cst_48 = arith.constant 5.000000e-01 : f32
    %138 = vector.broadcast %cst_48 : f32 to vector<16x256xf32>
    %139 = arith.mulf %138, %137 : vector<16x256xf32>
    %cst_49 = arith.constant 2.000000e+00 : f32
    %140 = math.sqrt %cst_49 : f32
    %cst_50 = arith.constant 1.000000e+00 : f32
    %141 = arith.divf %cst_50, %140 : f32
    %142 = vector.broadcast %141 : f32 to vector<16x256xf32>
    %143 = arith.mulf %137, %142 : vector<16x256xf32>
    %144 = math.erf %143 : vector<16x256xf32>
    %cst_51 = arith.constant 1.000000e+00 : f32
    %145 = vector.broadcast %cst_51 : f32 to vector<16x256xf32>
    %146 = arith.addf %145, %144 : vector<16x256xf32>
    %147 = arith.mulf %139, %146 : vector<16x256xf32>
    %148 = arith.truncf %147 : vector<16x256xf32> to vector<16x256xbf16>
    %c0_52 = arith.constant 0 : index
    %c0_53 = arith.constant 0 : index
    %149 = vector.load %arg12[%c0_52, %c0_53] : memref<256x64xbf16, #tpu.memory_space<vmem>>, vector<256x64xbf16>
    %cst_54 = arith.constant dense<0.000000e+00> : vector<16x64xf32>
    %150 = tpu.matmul %148, %149, %cst_54 {dimension_numbers = #tpu.dot_dimension_numbers<[1], [0], [0], [1], [0, 0, 1, 1], [], []>} : vector<16x256xbf16>, vector<256x64xbf16>, vector<16x64xf32> -> vector<16x64xf32>
    %151 = vector.broadcast %8 : vector<1x64xf32> to vector<16x64xf32>
    %152 = arith.addf %150, %151 : vector<16x64xf32>
    %153 = arith.addf %108, %152 : vector<16x64xf32>
    %c0_55 = arith.constant 0 : index
    %c0_56 = arith.constant 0 : index
    %c0_57 = arith.constant 0 : index
    %154 = vector.load %arg14[%c0_55, %c0_56, %c0_57] : memref<1x16x64xf32, #tpu.memory_space<vmem>>, vector<1x16x64xf32>
    %155 = vector.shape_cast %154 : vector<1x16x64xf32> to vector<16x64xf32>
    %156 = vector.shape_cast %153 : vector<16x64xf32> to vector<1x16x64xf32>
    tpu.vector_store %arg14[%c0_55, %c0_56, %c0_57], %156 {strides = array<i32>} : memref<1x16x64xf32, #tpu.memory_space<vmem>>, vector<1x16x64xf32>,
    return
  }
  func.func @transform_0(%arg0: i32) -> (i32, i32, i32) {
    %c0_i32 = arith.constant 0 : i32
    %c0_i32_0 = arith.constant 0 : i32
    %c0_i32_1 = arith.constant 0 : i32
    return %arg0, %c0_i32, %c0_i32_0 : i32, i32, i32
  }
  func.func @transform_1(%arg0: i32) -> (i32, i32) {
    %c0_i32 = arith.constant 0 : i32
    %c0_i32_0 = arith.constant 0 : i32
    %c0_i32_1 = arith.constant 0 : i32
    return %c0_i32, %c0_i32_0 : i32, i32
  }
  func.func @transform_2(%arg0: i32) -> (i32, i32) {
    %c0_i32 = arith.constant 0 : i32
    %c0_i32_0 = arith.constant 0 : i32
    %c0_i32_1 = arith.constant 0 : i32
    return %c0_i32, %c0_i32_0 : i32, i32
  }
  func.func @transform_3(%arg0: i32) -> (i32, i32) {
    %c0_i32 = arith.constant 0 : i32
    %c0_i32_0 = arith.constant 0 : i32
    %c0_i32_1 = arith.constant 0 : i32
    return %c0_i32, %c0_i32_0 : i32, i32
  }
  func.func @transform_4(%arg0: i32) -> (i32, i32) {
    %c0_i32 = arith.constant 0 : i32
    %c0_i32_0 = arith.constant 0 : i32
    %c0_i32_1 = arith.constant 0 : i32
    return %c0_i32, %c0_i32_0 : i32, i32
  }
  func.func @transform_5(%arg0: i32) -> (i32, i32) {
    %c0_i32 = arith.constant 0 : i32
    %c0_i32_0 = arith.constant 0 : i32
    %c0_i32_1 = arith.constant 0 : i32
    return %c0_i32, %c0_i32_0 : i32, i32
  }
  func.func @transform_6(%arg0: i32) -> (i32, i32) {
    %c0_i32 = arith.constant 0 : i32
    %c0_i32_0 = arith.constant 0 : i32
    %c0_i32_1 = arith.constant 0 : i32
    return %c0_i32, %c0_i32_0 : i32, i32
  }
  func.func @transform_7(%arg0: i32) -> (i32, i32) {
    %c0_i32 = arith.constant 0 : i32
    %c0_i32_0 = arith.constant 0 : i32
    %c0_i32_1 = arith.constant 0 : i32
    return %c0_i32, %c0_i32_0 : i32, i32
  }
  func.func @transform_8(%arg0: i32) -> (i32, i32) {
    %c0_i32 = arith.constant 0 : i32
    %c0_i32_0 = arith.constant 0 : i32
    %c0_i32_1 = arith.constant 0 : i32
    return %c0_i32, %c0_i32_0 : i32, i32
  }
  func.func @transform_9(%arg0: i32) -> (i32, i32) {
    %c0_i32 = arith.constant 0 : i32
    %c0_i32_0 = arith.constant 0 : i32
    %c0_i32_1 = arith.constant 0 : i32
    return %c0_i32, %c0_i32_0 : i32, i32
  }
  func.func @transform_10(%arg0: i32) -> (i32, i32) {
    %c0_i32 = arith.constant 0 : i32
    %c0_i32_0 = arith.constant 0 : i32
    %c0_i32_1 = arith.constant 0 : i32
    return %c0_i32, %c0_i32_0 : i32, i32
  }
  func.func @transform_11(%arg0: i32) -> (i32, i32) {
    %c0_i32 = arith.constant 0 : i32
    %c0_i32_0 = arith.constant 0 : i32
    %c0_i32_1 = arith.constant 0 : i32
    return %c0_i32, %c0_i32_0 : i32, i32
  }
  func.func @transform_12(%arg0: i32) -> (i32, i32) {
    %c0_i32 = arith.constant 0 : i32
    %c0_i32_0 = arith.constant 0 : i32
    %c0_i32_1 = arith.constant 0 : i32
    return %c0_i32, %c0_i32_0 : i32, i32
  }
  func.func @transform_13(%arg0: i32) -> (i32, i32, i32) {
    %c0_i32 = arith.constant 0 : i32
    %c0_i32_0 = arith.constant 0 : i32
    %c0_i32_1 = arith.constant 0 : i32
    return %arg0, %c0_i32, %c0_i32_0 : i32, i32, i32
  }
}

</mosaic_0001>

<llo_original>
// kernel: tpu_custom_call.1
$region0: #{tpu_custom_call.1}
  #allocation0 [shape = 'u32[]', space=smem, size = 0x4, offset = 0x4, fixed_abs, tag = 'smem constant byte address 0x4 - core index']
  #allocation1 [shape = 'u32[144,128]{1,0:T(1,128)}', space=vmem, size = 0x12000, scoped, tag = 'internal scratch']
  #allocation2 [shape = 'bf16[16,64]{1,0:T(8,128)(2,1)}', space=vmem, size = 0x1000, scoped, tag = 'scratch operand']
  %s0 = inlined_call_operand.vmem [shape: f32[4,16,64], index: 0, kind: input, shape index: {}]
  %s1 = inlined_call_operand.hbm [shape: f32[1,64], index: 1, kind: input, shape index: {}]
  %s2 = inlined_call_operand.vmem [shape: f32[1,64], index: 2, kind: input, shape index: {}]
  %s3 = inlined_call_operand.vmem [shape: bf16[64,208], index: 3, kind: input, shape index: {}]
  %s4 = inlined_call_operand.hbm [shape: bf16[16,128], index: 4, kind: input, shape index: {}]
  %s5 = inlined_call_operand.hbm [shape: bf16[64,64], index: 5, kind: input, shape index: {}]
  %s6 = inlined_call_operand.vmem [shape: f32[1,64], index: 6, kind: input, shape index: {}]
  %s7 = inlined_call_operand.vmem [shape: f32[1,64], index: 7, kind: input, shape index: {}]
  %s8 = inlined_call_operand.vmem [shape: f32[1,64], index: 8, kind: input, shape index: {}]
  %s9 = inlined_call_operand.vmem [shape: bf16[64,256], index: 9, kind: input, shape index: {}]
  %s10 = inlined_call_operand.vmem [shape: f32[1,256], index: 10, kind: input, shape index: {}]
  %s11 = inlined_call_operand.vmem [shape: bf16[256,64], index: 11, kind: input, shape index: {}]
  %s12 = inlined_call_operand.vmem [shape: f32[1,64], index: 12, kind: input, shape index: {}]
  %s13 = inlined_call_operand.hbm [shape: f32[4,16,64], index: 13, kind: output, shape index: {}]
  %s14 = sld [smem:[#allocation0]]
  $region97: #{tpu_custom_call.1} parent=0
    _
  %s16 = ssub.s32 1, %s14
  %s17 = scalar_select 0, %s16, %s14
  $region1: #{tpu_custom_call.1} parent=0
    #allocation3 [shape = 'u8[512]{0}', space=vmem, size = 0x400, scoped, tag = 'input window, operand 1, single buffered']
    #allocation4 [shape = 's32[2]{0}', space=sflag, size = 0x8, scoped, tag = 'scoped memory for tpu_custom_call.1']
    #allocation5 [shape = 's32[2]{0}', space=sflag, size = 0x8, scoped, tag = 'scoped memory for tpu_custom_call.1']
    #allocation6 [shape = 'u8[4096]{0}', space=vmem, size = 0x1000, scoped, tag = 'input window, operand 4, single buffered']
    #allocation7 [shape = 's32[1]{0}', space=sflag, size = 0x4, scoped, tag = 'scoped memory for tpu_custom_call.1']
    #allocation8 [shape = 'u8[16384]{0}', space=vmem, size = 0x4000, scoped, tag = 'input window, operand 5, single buffered']
    #allocation9 [shape = 'u8[16384]{0}', space=vmem, size = 0x4000, scoped, tag = 'output window, operand 0']
    %18 = vsyncpa [#allocation4], 0
    %19 = vsyncpa [#allocation7], 0
    %20 = vsyncpa [#allocation5], 0
    %s21 = scalar_lea.sflag [#allocation5], 1
    %22 = vsyncpa %s21, 0
    loop: start=0, step=1, limit=6
    $region2: #{tpu_custom_call.1} parent=1 // loop_pre_header
      _
    $region3: #{tpu_custom_call.1} parent=1 // loop_header
      %s24 = sphi 0, %s28
      %p25 = scmp.ge.s32.totalorder %s24, 6
      %s34 = sphi 0, %s36
      %s37 = sphi 0, %s34
      %s38 = sphi 0, %s37
      %s54 = sphi 0, %s38
      %s58 = sphi 0, %s58
      %s60 = sphi 0, %s58
      %s61 = sphi 0, %s60
      %s75 = sphi 0, %s61
      %s79 = sphi 0, %s79
      %s81 = sphi 0, %s79
      %s82 = sphi 0, %s81
      %s96 = sphi 0, %s82
      %s100 = sphi 0, %s100
      %s102 = sphi 0, %s100
      %s103 = sphi 0, %s102
      %s117 = sphi 0, %s103
      %s121 = sphi 0, %s121
      %s123 = sphi 0, %s121
      %s124 = sphi 0, %s123
      %s138 = sphi 0, %s124
      %s142 = sphi 0, %s142
      %s144 = sphi 0, %s142
      %s145 = sphi 0, %s144
      %s159 = sphi 0, %s145
      %s163 = sphi 0, %s163
      %s165 = sphi 0, %s163
      %s166 = sphi 0, %s165
      %s180 = sphi 0, %s166
      %s184 = sphi 0, %s184
      %s186 = sphi 0, %s184
      %s187 = sphi 0, %s186
      %s201 = sphi 0, %s187
      %s205 = sphi 0, %s205
      %s207 = sphi 0, %s205
      %s208 = sphi 0, %s207
      %s222 = sphi 0, %s208
      %s226 = sphi 0, %s226
      %s228 = sphi 0, %s226
      %s229 = sphi 0, %s228
      %s243 = sphi 0, %s229
      %s247 = sphi 0, %s247
      %s249 = sphi 0, %s247
      %s250 = sphi 0, %s249
      %s264 = sphi 0, %s250
      %s268 = sphi 0, %s268
      %s270 = sphi 0, %s268
      %s271 = sphi 0, %s270
      %s285 = sphi 0, %s271
      %s289 = sphi 0, %s289
      %s291 = sphi 0, %s289
      %s292 = sphi 0, %s291
      %s306 = sphi 0, %s292
      %s312 = sphi 0, %s314
      %s315 = sphi 0, %s312
      %s316 = sphi 0, %s315
      %s332 = sphi 0, %s316
    $region4: #{tpu_custom_call.1} parent=1 // loop_header_branch
      %27 = sbr.rel (%p25) target = $region8
    $region5: #{tpu_custom_call.1} parent=1 // loop_body
      %s29 = ssub.s32 %s24, 1
      %s30 = ssub.s32 %s24, 2
      %s31 = sadd.s32 %s24, 1
      %s32 = ssub.s32 %s24, %s31
      %p33 = scmp.eq.s32.totalorder %s32, 0
      %s35 = sadd.s32 %s34, 1
      %s36 = scalar_select %p33, %s34, %s35
      %p39 = pneg %p33
      %p40 = scmp.eq.s32.totalorder %s24, 3
      %p41 = por %p39, %p40
      %p42 = scmp.ne.s32.totalorder %s34, %s37
      %p43 = scmp.eq.s32.totalorder %s24, 0
      %p44 = por %p42, %p43
      %p45 = scmp.ne.s32.totalorder %s34, %s37
      %p46 = scmp.eq.s32.totalorder %s29, 3
      %p47 = por %p45, %p46
      %p48 = scmp.ne.s32.totalorder %s37, %s38
      %p49 = scmp.eq.s32.totalorder %s29, 0
      %p50 = por %p48, %p49
      %p51 = scmp.ne.s32.totalorder %s37, %s38
      %p52 = scmp.eq.s32.totalorder %s30, 3
      %p53 = por %p51, %p52
      %p55 = scmp.ne.s32.totalorder %s38, %s54
      %p56 = scmp.eq.s32.totalorder %s30, 0
      %p57 = por %p55, %p56
      %s59 = sadd.s32 %s58, 1
      %p62 = scmp.eq.s32.totalorder %s24, 3
      %p63 = scmp.ne.s32.totalorder %s58, %s60
      %p64 = scmp.eq.s32.totalorder %s24, 0
      %p65 = por %p63, %p64
      %p66 = scmp.ne.s32.totalorder %s58, %s60
      %p67 = scmp.eq.s32.totalorder %s29, 3
      %p68 = por %p66, %p67
      %p69 = scmp.ne.s32.totalorder %s60, %s61
      %p70 = scmp.eq.s32.totalorder %s29, 0
      %p71 = por %p69, %p70
      %p72 = scmp.ne.s32.totalorder %s60, %s61
      %p73 = scmp.eq.s32.totalorder %s30, 3
      %p74 = por %p72, %p73
      %p76 = scmp.ne.s32.totalorder %s61, %s75
      %p77 = scmp.eq.s32.totalorder %s30, 0
      %p78 = por %p76, %p77
      %s80 = sadd.s32 %s79, 1
      %p83 = scmp.eq.s32.totalorder %s24, 3
      %p84 = scmp.ne.s32.totalorder %s79, %s81
      %p85 = scmp.eq.s32.totalorder %s24, 0
      %p86 = por %p84, %p85
      %p87 = scmp.ne.s32.totalorder %s79, %s81
      %p88 = scmp.eq.s32.totalorder %s29, 3
      %p89 = por %p87, %p88
      %p90 = scmp.ne.s32.totalorder %s81, %s82
      %p91 = scmp.eq.s32.totalorder %s29, 0
      %p92 = por %p90, %p91
      %p93 = scmp.ne.s32.totalorder %s81, %s82
      %p94 = scmp.eq.s32.totalorder %s30, 3
      %p95 = por %p93, %p94
      %p97 = scmp.ne.s32.totalorder %s82, %s96
      %p98 = scmp.eq.s32.totalorder %s30, 0
      %p99 = por %p97, %p98
      %s101 = sadd.s32 %s100, 1
      %p104 = scmp.eq.s32.totalorder %s24, 3
      %p105 = scmp.ne.s32.totalorder %s100, %s102
      %p106 = scmp.eq.s32.totalorder %s24, 0
      %p107 = por %p105, %p106
      %p108 = scmp.ne.s32.totalorder %s100, %s102
      %p109 = scmp.eq.s32.totalorder %s29, 3
      %p110 = por %p108, %p109
      %p111 = scmp.ne.s32.totalorder %s102, %s103
      %p112 = scmp.eq.s32.totalorder %s29, 0
      %p113 = por %p111, %p112
      %p114 = scmp.ne.s32.totalorder %s102, %s103
      %p115 = scmp.eq.s32.totalorder %s30, 3
      %p116 = por %p114, %p115
      %p118 = scmp.ne.s32.totalorder %s103, %s117
      %p119 = scmp.eq.s32.totalorder %s30, 0
      %p120 = por %p118, %p119
      %s122 = sadd.s32 %s121, 1
      %p125 = scmp.eq.s32.totalorder %s24, 3
      %p126 = scmp.ne.s32.totalorder %s121, %s123
      %p127 = scmp.eq.s32.totalorder %s24, 0
      %p128 = por %p126, %p127
      %p129 = scmp.ne.s32.totalorder %s121, %s123
      %p130 = scmp.eq.s32.totalorder %s29, 3
      %p131 = por %p129, %p130
      %p132 = scmp.ne.s32.totalorder %s123, %s124
      %p133 = scmp.eq.s32.totalorder %s29, 0
      %p134 = por %p132, %p133
      %p135 = scmp.ne.s32.totalorder %s123, %s124
      %p136 = scmp.eq.s32.totalorder %s30, 3
      %p137 = por %p135, %p136
      %p139 = scmp.ne.s32.totalorder %s124, %s138
      %p140 = scmp.eq.s32.totalorder %s30, 0
      %p141 = por %p139, %p140
      %s143 = sadd.s32 %s142, 1
      %p146 = scmp.eq.s32.totalorder %s24, 3
      %p147 = scmp.ne.s32.totalorder %s142, %s144
      %p148 = scmp.eq.s32.totalorder %s24, 0
      %p149 = por %p147, %p148
      %p150 = scmp.ne.s32.totalorder %s142, %s144
      %p151 = scmp.eq.s32.totalorder %s29, 3
      %p152 = por %p150, %p151
      %p153 = scmp.ne.s32.totalorder %s144, %s145
      %p154 = scmp.eq.s32.totalorder %s29, 0
      %p155 = por %p153, %p154
      %p156 = scmp.ne.s32.totalorder %s144, %s145
      %p157 = scmp.eq.s32.totalorder %s30, 3
      %p158 = por %p156, %p157
      %p160 = scmp.ne.s32.totalorder %s145, %s159
      %p161 = scmp.eq.s32.totalorder %s30, 0
      %p162 = por %p160, %p161
      %s164 = sadd.s32 %s163, 1
      %p167 = scmp.eq.s32.totalorder %s24, 3
      %p168 = scmp.ne.s32.totalorder %s163, %s165
      %p169 = scmp.eq.s32.totalorder %s24, 0
      %p170 = por %p168, %p169
      %p171 = scmp.ne.s32.totalorder %s163, %s165
      %p172 = scmp.eq.s32.totalorder %s29, 3
      %p173 = por %p171, %p172
      %p174 = scmp.ne.s32.totalorder %s165, %s166
      %p175 = scmp.eq.s32.totalorder %s29, 0
      %p176 = por %p174, %p175
      %p177 = scmp.ne.s32.totalorder %s165, %s166
      %p178 = scmp.eq.s32.totalorder %s30, 3
      %p179 = por %p177, %p178
      %p181 = scmp.ne.s32.totalorder %s166, %s180
      %p182 = scmp.eq.s32.totalorder %s30, 0
      %p183 = por %p181, %p182
      %s185 = sadd.s32 %s184, 1
      %p188 = scmp.eq.s32.totalorder %s24, 3
      %p189 = scmp.ne.s32.totalorder %s184, %s186
      %p190 = scmp.eq.s32.totalorder %s24, 0
      %p191 = por %p189, %p190
      %p192 = scmp.ne.s32.totalorder %s184, %s186
      %p193 = scmp.eq.s32.totalorder %s29, 3
      %p194 = por %p192, %p193
      %p195 = scmp.ne.s32.totalorder %s186, %s187
      %p196 = scmp.eq.s32.totalorder %s29, 0
      %p197 = por %p195, %p196
      %p198 = scmp.ne.s32.totalorder %s186, %s187
      %p199 = scmp.eq.s32.totalorder %s30, 3
      %p200 = por %p198, %p199
      %p202 = scmp.ne.s32.totalorder %s187, %s201
      %p203 = scmp.eq.s32.totalorder %s30, 0
      %p204 = por %p202, %p203
      %s206 = sadd.s32 %s205, 1
      %p209 = scmp.eq.s32.totalorder %s24, 3
      %p210 = scmp.ne.s32.totalorder %s205, %s207
      %p211 = scmp.eq.s32.totalorder %s24, 0
      %p212 = por %p210, %p211
      %p213 = scmp.ne.s32.totalorder %s205, %s207
      %p214 = scmp.eq.s32.totalorder %s29, 3
      %p215 = por %p213, %p214
      %p216 = scmp.ne.s32.totalorder %s207, %s208
      %p217 = scmp.eq.s32.totalorder %s29, 0
      %p218 = por %p216, %p217
      %p219 = scmp.ne.s32.totalorder %s207, %s208
      %p220 = scmp.eq.s32.totalorder %s30, 3
      %p221 = por %p219, %p220
      %p223 = scmp.ne.s32.totalorder %s208, %s222
      %p224 = scmp.eq.s32.totalorder %s30, 0
      %p225 = por %p223, %p224
      %s227 = sadd.s32 %s226, 1
      %p230 = scmp.eq.s32.totalorder %s24, 3
      %p231 = scmp.ne.s32.totalorder %s226, %s228
      %p232 = scmp.eq.s32.totalorder %s24, 0
      %p233 = por %p231, %p232
      %p234 = scmp.ne.s32.totalorder %s226, %s228
      %p235 = scmp.eq.s32.totalorder %s29, 3
      %p236 = por %p234, %p235
      %p237 = scmp.ne.s32.totalorder %s228, %s229
      %p238 = scmp.eq.s32.totalorder %s29, 0
      %p239 = por %p237, %p238
      %p240 = scmp.ne.s32.totalorder %s228, %s229
      %p241 = scmp.eq.s32.totalorder %s30, 3
      %p242 = por %p240, %p241
      %p244 = scmp.ne.s32.totalorder %s229, %s243
      %p245 = scmp.eq.s32.totalorder %s30, 0
      %p246 = por %p244, %p245
      %s248 = sadd.s32 %s247, 1
      %p251 = scmp.eq.s32.totalorder %s24, 3
      %p252 = scmp.ne.s32.totalorder %s247, %s249
      %p253 = scmp.eq.s32.totalorder %s24, 0
      %p254 = por %p252, %p253
      %p255 = scmp.ne.s32.totalorder %s247, %s249
      %p256 = scmp.eq.s32.totalorder %s29, 3
      %p257 = por %p255, %p256
      %p258 = scmp.ne.s32.totalorder %s249, %s250
      %p259 = scmp.eq.s32.totalorder %s29, 0
      %p260 = por %p258, %p259
      %p261 = scmp.ne.s32.totalorder %s249, %s250
      %p262 = scmp.eq.s32.totalorder %s30, 3
      %p263 = por %p261, %p262
      %p265 = scmp.ne.s32.totalorder %s250, %s264
      %p266 = scmp.eq.s32.totalorder %s30, 0
      %p267 = por %p265, %p266
      %s269 = sadd.s32 %s268, 1
      %p272 = scmp.eq.s32.totalorder %s24, 3
      %p273 = scmp.ne.s32.totalorder %s268, %s270
      %p274 = scmp.eq.s32.totalorder %s24, 0
      %p275 = por %p273, %p274
      %p276 = scmp.ne.s32.totalorder %s268, %s270
      %p277 = scmp.eq.s32.totalorder %s29, 3
      %p278 = por %p276, %p277
      %p279 = scmp.ne.s32.totalorder %s270, %s271
      %p280 = scmp.eq.s32.totalorder %s29, 0
      %p281 = por %p279, %p280
      %p282 = scmp.ne.s32.totalorder %s270, %s271
      %p283 = scmp.eq.s32.totalorder %s30, 3
      %p284 = por %p282, %p283
      %p286 = scmp.ne.s32.totalorder %s271, %s285
      %p287 = scmp.eq.s32.totalorder %s30, 0
      %p288 = por %p286, %p287
      %s290 = sadd.s32 %s289, 1
      %p293 = scmp.eq.s32.totalorder %s24, 3
      %p294 = scmp.ne.s32.totalorder %s289, %s291
      %p295 = scmp.eq.s32.totalorder %s24, 0
      %p296 = por %p294, %p295
      %p297 = scmp.ne.s32.totalorder %s289, %s291
      %p298 = scmp.eq.s32.totalorder %s29, 3
      %p299 = por %p297, %p298
      %p300 = scmp.ne.s32.totalorder %s291, %s292
      %p301 = scmp.eq.s32.totalorder %s29, 0
      %p302 = por %p300, %p301
      %p303 = scmp.ne.s32.totalorder %s291, %s292
      %p304 = scmp.eq.s32.totalorder %s30, 3
      %p305 = por %p303, %p304
      %p307 = scmp.ne.s32.totalorder %s292, %s306
      %p308 = scmp.eq.s32.totalorder %s30, 0
      %p309 = por %p307, %p308
      %s310 = ssub.s32 %s24, %s31
      %p311 = scmp.eq.s32.totalorder %s310, 0
      %s313 = sadd.s32 %s312, 1
      %s314 = scalar_select %p311, %s312, %s313
      %p317 = pneg %p311
      %p318 = scmp.eq.s32.totalorder %s24, 3
      %p319 = por %p317, %p318
      %p320 = scmp.ne.s32.totalorder %s312, %s315
      %p321 = scmp.eq.s32.totalorder %s24, 0
      %p322 = por %p320, %p321
      %p323 = scmp.ne.s32.totalorder %s312, %s315
      %p324 = scmp.eq.s32.totalorder %s29, 3
      %p325 = por %p323, %p324
      %p326 = scmp.ne.s32.totalorder %s315, %s316
      %p327 = scmp.eq.s32.totalorder %s29, 0
      %p328 = por %p326, %p327
      %p329 = scmp.ne.s32.totalorder %s315, %s316
      %p330 = scmp.eq.s32.totalorder %s30, 3
      %p331 = por %p329, %p330
      %p333 = scmp.ne.s32.totalorder %s316, %s332
      %p334 = scmp.eq.s32.totalorder %s30, 0
      %p335 = por %p333, %p334
      %p336 = scmp.le.s32.totalorder 1, %s24
      %p337 = scmp.lt.s32.totalorder %s24, 5
      %p338 = pnand %p336, %p337
      %p339 = pneg %p338
      // Predicated region
      $region9: #{tpu_custom_call.1} parent=5 // pred_check
        _
      $region10: #{tpu_custom_call.1} parent=5 // pred_check_branch
        %341 = sbr.rel (%p338) target = $region12
      $region11: #{tpu_custom_call.1} parent=5 // pred_region
        %s342 = ssub.s32 %s24, 1
        // Predicated region
        $region13: #{tpu_custom_call.1} parent=11 // pred_check
          %p343 = pneg %p71
        $region14: #{tpu_custom_call.1} parent=11 // pred_check_branch
          %345 = sbr.rel (%p343) target = $region16
        $region15: #{tpu_custom_call.1} parent=11 // pred_region
          %s347 = ssub.s32 16, 16
          %348 = vsyncadd [#allocation4], %s347
          %s350 = sshll.u32 [#allocation3], 4
          %s351 = int_to_ptr.vmem [resolvable:$true] %s350
          %353 = dma.hbm_to_vmem [thread:$0]  %s1, 16, %s351, [#allocation4]
        $region16: #{tpu_custom_call.1} parent=11 // pred_fallthru
          _
        // Predicated region
        $region17: #{tpu_custom_call.1} parent=11 // pred_check
          %p354 = pneg %p92
        $region18: #{tpu_custom_call.1} parent=11 // pred_check_branch
          %356 = sbr.rel (%p354) target = $region20
        $region19: #{tpu_custom_call.1} parent=11 // pred_region
          _
        $region20: #{tpu_custom_call.1} parent=11 // pred_fallthru
          _
        // Predicated region
        $region21: #{tpu_custom_call.1} parent=11 // pred_check
          %p357 = pneg %p113
        $region22: #{tpu_custom_call.1} parent=11 // pred_check_branch
          %359 = sbr.rel (%p357) target = $region24
        $region23: #{tpu_custom_call.1} parent=11 // pred_region
          _
        $region24: #{tpu_custom_call.1} parent=11 // pred_fallthru
          _
        // Predicated region
        $region25: #{tpu_custom_call.1} parent=11 // pred_check
          %p360 = pneg %p134
        $region26: #{tpu_custom_call.1} parent=11 // pred_check_branch
          %362 = sbr.rel (%p360) target = $region28
        $region27: #{tpu_custom_call.1} parent=11 // pred_region
          %s364 = ssub.s32 128, 128
          %365 = vsyncadd [#allocation7], %s364
          %s366 = sshll.u32 [#allocation6], 4
          %s367 = int_to_ptr.vmem [resolvable:$true] %s366
          %372 = dma.hbm_to_vmem [thread:$0]  %s4, 128, %s367, [#allocation7], 64, 64, 4
        $region28: #{tpu_custom_call.1} parent=11 // pred_fallthru
          _
        // Predicated region
        $region29: #{tpu_custom_call.1} parent=11 // pred_check
          %p373 = pneg %p155
        $region30: #{tpu_custom_call.1} parent=11 // pred_check_branch
          %375 = sbr.rel (%p373) target = $region32
        $region31: #{tpu_custom_call.1} parent=11 // pred_region
          %s377 = ssub.s32 512, 512
          %378 = vsyncadd [#allocation7], %s377
          %s379 = sshll.u32 [#allocation8], 4
          %s380 = int_to_ptr.vmem [resolvable:$true] %s379
          %385 = dma.hbm_to_vmem [thread:$0]  %s5, 512, %s380, [#allocation7], 64, 64, 4
        $region32: #{tpu_custom_call.1} parent=11 // pred_fallthru
          _
        // Predicated region
        $region33: #{tpu_custom_call.1} parent=11 // pred_check
          %p386 = pneg %p176
        $region34: #{tpu_custom_call.1} parent=11 // pred_check_branch
          %388 = sbr.rel (%p386) target = $region36
        $region35: #{tpu_custom_call.1} parent=11 // pred_region
          _
        $region36: #{tpu_custom_call.1} parent=11 // pred_fallthru
          _
        // Predicated region
        $region37: #{tpu_custom_call.1} parent=11 // pred_check
          %p389 = pneg %p197
        $region38: #{tpu_custom_call.1} parent=11 // pred_check_branch
          %391 = sbr.rel (%p389) target = $region40
        $region39: #{tpu_custom_call.1} parent=11 // pred_region
          _
        $region40: #{tpu_custom_call.1} parent=11 // pred_fallthru
          _
        // Predicated region
        $region41: #{tpu_custom_call.1} parent=11 // pred_check
          %p392 = pneg %p218
        $region42: #{tpu_custom_call.1} parent=11 // pred_check_branch
          %394 = sbr.rel (%p392) target = $region44
        $region43: #{tpu_custom_call.1} parent=11 // pred_region
          _
        $region44: #{tpu_custom_call.1} parent=11 // pred_fallthru
          _
        // Predicated region
        $region45: #{tpu_custom_call.1} parent=11 // pred_check
          %p395 = pneg %p239
        $region46: #{tpu_custom_call.1} parent=11 // pred_check_branch
          %397 = sbr.rel (%p395) target = $region48
        $region47: #{tpu_custom_call.1} parent=11 // pred_region
          _
        $region48: #{tpu_custom_call.1} parent=11 // pred_fallthru
          _
        // Predicated region
        $region49: #{tpu_custom_call.1} parent=11 // pred_check
          %p398 = pneg %p260
        $region50: #{tpu_custom_call.1} parent=11 // pred_check_branch
          %400 = sbr.rel (%p398) target = $region52
        $region51: #{tpu_custom_call.1} parent=11 // pred_region
          _
        $region52: #{tpu_custom_call.1} parent=11 // pred_fallthru
          _
        // Predicated region
        $region53: #{tpu_custom_call.1} parent=11 // pred_check
          %p401 = pneg %p281
        $region54: #{tpu_custom_call.1} parent=11 // pred_check_branch
          %403 = sbr.rel (%p401) target = $region56
        $region55: #{tpu_custom_call.1} parent=11 // pred_region
          _
        $region56: #{tpu_custom_call.1} parent=11 // pred_fallthru
          _
        // Predicated region
        $region57: #{tpu_custom_call.1} parent=11 // pred_check
          %p404 = pneg %p302
        $region58: #{tpu_custom_call.1} parent=11 // pred_check_branch
          %406 = sbr.rel (%p404) target = $region60
        $region59: #{tpu_custom_call.1} parent=11 // pred_region
          _
        $region60: #{tpu_custom_call.1} parent=11 // pred_fallthru
          _
      $region12: #{tpu_custom_call.1} parent=5 // pred_fallthru
        _
      %p407 = scmp.lt.s32.totalorder %s24, 4
      // Predicated region
      $region61: #{tpu_custom_call.1} parent=5 // pred_check
        %p408 = pneg %p407
      $region62: #{tpu_custom_call.1} parent=5 // pred_check_branch
        %410 = sbr.rel (%p408) target = $region64
      $region63: #{tpu_custom_call.1} parent=5 // pred_region
        // Predicated region
        $region65: #{tpu_custom_call.1} parent=63 // pred_check
          %p411 = pneg %p44
        $region66: #{tpu_custom_call.1} parent=63 // pred_check_branch
          %413 = sbr.rel (%p411) target = $region68
        $region67: #{tpu_custom_call.1} parent=63 // pred_region
          %p414 = scmp.lt.s32.totalorder %s24, 3
          %s415 = scalar_select %p414, %s24, 3
          %s416 = smul.addr %s415, 2
          %s417 = smul.addr %s416, 8
          %s418 = scalar_lea.vmem %s0, %s417
        $region68: #{tpu_custom_call.1} parent=63 // pred_fallthru
          _
      $region64: #{tpu_custom_call.1} parent=5 // pred_fallthru
        _
      %p419 = scmp.le.s32.totalorder 1, %s24
      %p420 = scmp.lt.s32.totalorder %s24, 5
      %p421 = pnand %p419, %p420
      %p422 = pneg %p421
      // Predicated region
      $region69: #{tpu_custom_call.1} parent=5 // pred_check
        _
      $region70: #{tpu_custom_call.1} parent=5 // pred_check_branch
        %424 = sbr.rel (%p421) target = $region72
      $region71: #{tpu_custom_call.1} parent=5 // pred_region
        %s425 = ssub.s32 %s24, 1
        // Predicated region
        $region73: #{tpu_custom_call.1} parent=71 // pred_check
          %p426 = pneg %p71
        $region74: #{tpu_custom_call.1} parent=71 // pred_check_branch
          %428 = sbr.rel (%p426) target = $region76
        $region75: #{tpu_custom_call.1} parent=71 // pred_region
          %429 = dma.done [#allocation4], 16
        $region76: #{tpu_custom_call.1} parent=71 // pred_fallthru
          _
        // Predicated region
        $region77: #{tpu_custom_call.1} parent=71 // pred_check
          %p430 = pneg %p134
        $region78: #{tpu_custom_call.1} parent=71 // pred_check_branch
          %432 = sbr.rel (%p430) target = $region80
        $region79: #{tpu_custom_call.1} parent=71 // pred_region
          %433 = dma.done [#allocation7], 128
        $region80: #{tpu_custom_call.1} parent=71 // pred_fallthru
          _
        // Predicated region
        $region81: #{tpu_custom_call.1} parent=71 // pred_check
          %p434 = pneg %p155
        $region82: #{tpu_custom_call.1} parent=71 // pred_check_branch
          %436 = sbr.rel (%p434) target = $region84
        $region83: #{tpu_custom_call.1} parent=71 // pred_region
          %437 = dma.done [#allocation7], 512
        $region84: #{tpu_custom_call.1} parent=71 // pred_fallthru
          _
        %p438 = scmp.lt.s32.totalorder %s29, 3
        %s439 = scalar_select %p438, %s29, 3
        %s440 = smul.addr %s439, 2
        %s441 = smul.addr %s440, 8
        %s442 = scalar_lea.vmem %s0, %s441
        %p443 = pneg %p50
        %p444 = pneg %p47
        %p445 = pneg %p71
        %p446 = pneg %p68
        %p447 = pneg %p92
        %p448 = pneg %p89
        %p449 = pneg %p113
        %p450 = pneg %p110
        %p451 = pneg %p134
        %p452 = pneg %p131
        %p453 = pneg %p155
        %p454 = pneg %p152
        %p455 = pneg %p176
        %p456 = pneg %p173
        %p457 = pneg %p197
        %p458 = pneg %p194
        %p459 = pneg %p218
        %p460 = pneg %p215
        %p461 = pneg %p239
        %p462 = pneg %p236
        %p463 = pneg %p260
        %p464 = pneg %p257
        %p465 = pneg %p281
        %p466 = pneg %p278
        %p467 = pneg %p302
        %p468 = pneg %p299
        %p469 = pneg %p328
        %p470 = pneg %p325
        %s471 = sand.u32 %s315, 1
        %s472 = scalar_lea.sflag [#allocation5], %s471
        %s473 = sand.u32 %s315, 1
        %s474 = smul.addr %s473, 16
        %s475 = scalar_lea.vmem [#allocation9], %s474
        %p476 = scmp.lt.s32.totalorder %s29, 3
        %s477 = scalar_select %p476, %s29, 3
        %s478 = smul.addr %s477, 2
        %s479 = smul.addr %s478, 8
        %s480 = scalar_lea.vmem %s0, %s479
        %v482 = vld [vmem:[%s480] sm:$0xff]
        %v483 = vld [vmem:[%s480 + $0x8] sm:$0xff]
        %v484 = vld [vmem:[#allocation3] sm:$0x1]
        %v485 = vld [vmem:[%s2] sm:$0x1]
        %v486 = vld [vmem:[%s7] sm:$0x1]
        %v487 = vld [vmem:[%s8] sm:$0x1]
        %v488 = vld [vmem:[%s6] sm:$0x1]
        %v489 = vld [vmem:[%s10] sm:$0x3]
        %v490 = vld [vmem:[%s12] sm:$0x1]
        %vm491 = vcmask 523264
        %v492 = vsel %vm491, %v482, 0.0
        %493 = vadd.xlane.f32.xlu0 %v492
        %v494 = vpop.xlane.xlu0 %493
        %v495 = vsel %vm491, %v483, 0.0
        %496 = vadd.xlane.f32.xlu0 %v495
        %v497 = vpop.xlane.xlu0 %496
        %v498 = vrcp.pop 64.0
        %v499 = vmul.f32 %v494, %v498
        %v500 = vmul.f32 %v497, %v498
        %v501 = vsub.f32 %v482, %v499
        %v502 = vsub.f32 %v483, %v500
        %v503 = vmul.f32 %v501, %v501
        %v504 = vmul.f32 %v502, %v502
        %v505 = vsel %vm491, %v503, 0.0
        %506 = vadd.xlane.f32.xlu0 %v505
        %v507 = vpop.xlane.xlu0 %506
        %v508 = vsel %vm491, %v504, 0.0
        %509 = vadd.xlane.f32.xlu0 %v508
        %v510 = vpop.xlane.xlu0 %509
        %v511 = vmul.f32 %v507, %v498
        %v512 = vmul.f32 %v510, %v498
        %v513 = vadd.f32 %v511, 1e-05
        %v514 = vadd.f32 %v512, 1e-05
        %v515 = vrsqrt.pop %v513
        %v516 = vrsqrt.pop %v514
        %v517 = vmul.f32 %v501, %v515
        %v518 = vmul.f32 %v502, %v516
        %v520 = vlaneseq
        %v521 = vshrl.u32 %v520, 7
        %v522 = vsub.s32 0, %v521
        %v523 = vrot.slane %v484, %v522
        %v525 = vmul.f32 %v517, %v523
        %v526 = vmul.f32 %v518, %v523
        %v528 = vlaneseq
        %v529 = vshrl.u32 %v528, 7
        %v530 = vsub.s32 0, %v529
        %v531 = vrot.slane %v485, %v530
        %v533 = vadd.f32 %v525, %v531
        %v534 = vadd.f32 %v526, %v531
        %v535 = vpack.c.bf16 %v534, %v533
        %v536 = vld [vmem:[%s3] sm:$0xff]
        %v537 = vld [vmem:[%s3 + $0x8] sm:$0xff]
        %v538 = vld [vmem:[%s3 + $0x10] sm:$0xff]
        %v539 = vld [vmem:[%s3 + $0x18] sm:$0xff]
        %v540 = vld [vmem:[%s3 + $0x20] sm:$0xff]
        %v541 = vld [vmem:[%s3 + $0x28] sm:$0xff]
        %v542 = vld [vmem:[%s3 + $0x30] sm:$0xff]
        %v543 = vld [vmem:[%s3 + $0x38] sm:$0xff]
        %v552 = vunpack.c.l.b16 %v536
        %v553 = vunpack.c.h.b16 %v536
        %v554 = vunpack.c.l.b16 %v537
        %v555 = vunpack.c.h.b16 %v537
        %v556 = vunpack.c.l.b16 %v538
        %v557 = vunpack.c.h.b16 %v538
        %v558 = vunpack.c.l.b16 %v539
        %v559 = vunpack.c.h.b16 %v539
        %v560 = vunpack.c.l.b16 %v540
        %v561 = vunpack.c.h.b16 %v540
        %v562 = vunpack.c.l.b16 %v541
        %v563 = vunpack.c.h.b16 %v541
        %v564 = vunpack.c.l.b16 %v542
        %v565 = vunpack.c.h.b16 %v542
        %v566 = vunpack.c.l.b16 %v543
        %v567 = vunpack.c.h.b16 %v543
        %v568 = vpack.c.b16 %v554, %v552
        %v569 = vpack.c.b16 %v555, %v553
        %v570 = vpack.c.b16 %v558, %v556
        %v571 = vpack.c.b16 %v559, %v557
        %v572 = vpack.c.b16 %v562, %v560
        %v573 = vpack.c.b16 %v563, %v561
        %v574 = vpack.c.b16 %v566, %v564
        %v575 = vpack.c.b16 %v567, %v565
        %v585 = vsel %vm491, %v535, 0
        %587 = vmatprep.subr.bf16.mxu0 0
        %588 = vmatpush1.bf16.msra.mxu0 0
        %589 = vmatprep.subr.bf16.mxu0 0
        %590 = vmatpush1.bf16.msra.mxu0 0
        %591 = vmatprep.subr.bf16.mxu0 0
        %592 = vmatpush1.bf16.msra.mxu0 0
        %593 = vmatprep.subr.bf16.mxu0 0
        %594 = vmatpush1.bf16.msra.mxu0 0
        %595 = vmatprep.subr.bf16.mxu0 %v575
        %596 = vmatpush1.bf16.msra.mxu0 %v574
        %597 = vmatprep.subr.bf16.mxu0 %v573
        %598 = vmatpush1.bf16.msra.mxu0 %v572
        %599 = vmatprep.subr.bf16.mxu0 %v571
        %600 = vmatpush1.bf16.msra.mxu0 %v570
        %601 = vmatprep.subr.bf16.mxu0 %v569
        %602 = vmatpush1.bf16.msra.mxu0 %v568
        %603 = vmatprep.subr.bf16.mxu0 0
        %604 = vmatpush2.bf16.msra.mxu0 0
        %605 = vmatprep.subr.bf16.mxu0 0
        %606 = vmatpush2.bf16.msra.mxu0 0
        %607 = vmatprep.subr.bf16.mxu0 0
        %608 = vmatpush2.bf16.msra.mxu0 0
        %609 = vmatprep.subr.bf16.mxu0 0
        %610 = vmatpush2.bf16.msra.mxu0 0
        %611 = vmatprep.subr.bf16.mxu0 0
        %612 = vmatpush2.bf16.msra.mxu0 0
        %613 = vmatprep.subr.bf16.mxu0 0
        %614 = vmatpush2.bf16.msra.mxu0 0
        %615 = vmatprep.subr.bf16.mxu0 0
        %616 = vmatpush2.bf16.msra.mxu0 0
        %617 = vmatprep.subr.bf16.mxu0 0
        %618 = vmatpush2.bf16.msra.mxu0 0
        %619 = vmatprep.mubr.bf16.mxu0 0
        %620 = vmatmul.mubr.bf16.gmra.mxu0 %v585
        %v621 = vpop.f32.mrf.mxu0
        %v622 = vadd.f32 0.0, %v621
        %v623 = vpop.f32.mrf.mxu0
        %v624 = vadd.f32 0.0, %v623
        %v625 = vpop.f32.mrf.mxu0
        %v626 = vadd.f32 0.0, %v625
        %v627 = vpop.f32.mrf.mxu0
        %v628 = vadd.f32 0.0, %v627
        %629 = vdwg.mxu0
        %v630 = vpack.c.bf16 %v628, %v624
        %v631 = vld [vmem:[#allocation6] sm:$0xf]
        %v632 = vld [vmem:[#allocation6 + $0x4] sm:$0xf]
        %634 = vrot.lane.b32.xlu0 %v630, 64
        %v635 = vpop.permute.xlu0 %634
        %v638 = vunpack.c.l.b16 %v631
        %v639 = vunpack.c.l.b16 %v632
        %v640 = vpack.c.b16 %v639, %v638
        %vm642 = vcmask 130048
        %v644 = vsel %vm642, %v635, 0
        %646 = vmatprep.subr.bf16.mxu0 0
        %647 = vmatpush1.bf16.msra.mxu0 0
        %648 = vmatprep.subr.bf16.mxu0 0
        %649 = vmatpush1.bf16.msra.mxu0 0
        %650 = vmatprep.subr.bf16.mxu0 0
        %651 = vmatpush1.bf16.msra.mxu0 0
        %652 = vmatprep.subr.bf16.mxu0 0
        %653 = vmatpush1.bf16.msra.mxu0 0
        %654 = vmatprep.subr.bf16.mxu0 0
        %655 = vmatpush1.bf16.msra.mxu0 0
        %656 = vmatprep.subr.bf16.mxu0 0
        %657 = vmatpush1.bf16.msra.mxu0 0
        %658 = vmatprep.subr.bf16.mxu0 0
        %659 = vmatpush1.bf16.msra.mxu0 0
        %660 = vmatprep.subr.bf16.mxu0 0
        %661 = vmatpush1.bf16.msra.mxu0 %v640
        %662 = vmatprep.subr.bf16.mxu0 0
        %663 = vmatpush2.bf16.msra.mxu0 0
        %664 = vmatprep.subr.bf16.mxu0 0
        %665 = vmatpush2.bf16.msra.mxu0 0
        %666 = vmatprep.subr.bf16.mxu0 0
        %667 = vmatpush2.bf16.msra.mxu0 0
        %668 = vmatprep.subr.bf16.mxu0 0
        %669 = vmatpush2.bf16.msra.mxu0 0
        %670 = vmatprep.subr.bf16.mxu0 0
        %671 = vmatpush2.bf16.msra.mxu0 0
        %672 = vmatprep.subr.bf16.mxu0 0
        %673 = vmatpush2.bf16.msra.mxu0 0
        %674 = vmatprep.subr.bf16.mxu0 0
        %675 = vmatpush2.bf16.msra.mxu0 0
        %676 = vmatprep.subr.bf16.mxu0 0
        %677 = vmatpush2.bf16.msra.mxu0 0
        %678 = vmatprep.mubr.bf16.mxu0 0
        %679 = vmatmul.mubr.bf16.gmra.mxu0 %v644
        %v680 = vpop.f32.mrf.mxu0
        %v681 = vadd.f32 0.0, %v680
        %v682 = vpop.f32.mrf.mxu0
        %v683 = vpop.f32.mrf.mxu0
        %v684 = vadd.f32 0.0, %v683
        %v685 = vpop.f32.mrf.mxu0
        %686 = vdwg.mxu0
        %v687 = vadd.f32 %v622, %v681
        %v688 = vadd.f32 %v626, %v684
        %691 = vrot.lane.b32.xlu0 %v681, 64
        %v692 = vpop.permute.xlu0 %691
        %693 = vrot.lane.b32.xlu0 %v684, 64
        %v694 = vpop.permute.xlu0 %693
        %v697 = vadd.f32 %v624, %v692
        %v698 = vadd.f32 %v628, %v694
        %701 = vrot.lane.b32.xlu0 %v687, 112
        %v702 = vpop.permute.xlu0 %701
        %703 = vrot.lane.b32.xlu0 %v688, 112
        %v704 = vpop.permute.xlu0 %703
        %707 = vrot.lane.b32.xlu0 %v687, 96
        %v708 = vpop.permute.xlu0 %707
        %709 = vrot.lane.b32.xlu0 %v688, 96
        %v710 = vpop.permute.xlu0 %709
        %713 = vrot.lane.b32.xlu0 %v687, 80
        %v714 = vpop.permute.xlu0 %713
        %715 = vrot.lane.b32.xlu0 %v688, 80
        %v716 = vpop.permute.xlu0 %715
        %v719 = vpack.c.bf16 %v688, %v687
        %v720 = vpack.c.bf16 %v704, %v702
        %v721 = vpack.c.bf16 %v710, %v708
        %v722 = vpack.c.bf16 %v716, %v714
        %725 = vrot.lane.b32.xlu0 %v622, 112
        %v726 = vpop.permute.xlu0 %725
        %727 = vrot.lane.b32.xlu0 %v626, 112
        %v728 = vpop.permute.xlu0 %727
        %731 = vrot.lane.b32.xlu0 %v622, 96
        %v732 = vpop.permute.xlu0 %731
        %733 = vrot.lane.b32.xlu0 %v626, 96
        %v734 = vpop.permute.xlu0 %733
        %737 = vrot.lane.b32.xlu0 %v622, 80
        %v738 = vpop.permute.xlu0 %737
        %739 = vrot.lane.b32.xlu0 %v626, 80
        %v740 = vpop.permute.xlu0 %739
        %v743 = vpack.c.bf16 %v626, %v622
        %v744 = vpack.c.bf16 %v728, %v726
        %v745 = vpack.c.bf16 %v734, %v732
        %v746 = vpack.c.bf16 %v740, %v738
        %749 = vrot.lane.b32.xlu0 %v697, 112
        %v750 = vpop.permute.xlu0 %749
        %751 = vrot.lane.b32.xlu0 %v698, 112
        %v752 = vpop.permute.xlu0 %751
        %755 = vrot.lane.b32.xlu0 %v697, 96
        %v756 = vpop.permute.xlu0 %755
        %757 = vrot.lane.b32.xlu0 %v698, 96
        %v758 = vpop.permute.xlu0 %757
        %761 = vrot.lane.b32.xlu0 %v697, 80
        %v762 = vpop.permute.xlu0 %761
        %763 = vrot.lane.b32.xlu0 %v698, 80
        %v764 = vpop.permute.xlu0 %763
        %v767 = vpack.c.bf16 %v698, %v697
        %v768 = vpack.c.bf16 %v752, %v750
        %v769 = vpack.c.bf16 %v758, %v756
        %v770 = vpack.c.bf16 %v764, %v762
        %772 = vrot.lane.b32.xlu0 %v743, 64
        %v773 = vpop.permute.xlu0 %772
        %v775 = vsel %vm642, %v719, 0
        %v778 = vsel %vm642, %v773, 0
        %780 = vmatprep.subr.bf16.mxu0 0
        %781 = vmatpush1.bf16.xpose.msra.mxu0 0
        %782 = vmatprep.subr.bf16.mxu0 0
        %783 = vmatpush1.bf16.xpose.msra.mxu0 0
        %784 = vmatprep.subr.bf16.mxu0 0
        %785 = vmatpush1.bf16.xpose.msra.mxu0 0
        %786 = vmatprep.subr.bf16.mxu0 0
        %787 = vmatpush1.bf16.xpose.msra.mxu0 0
        %788 = vmatprep.subr.bf16.mxu0 0
        %789 = vmatpush1.bf16.xpose.msra.mxu0 0
        %790 = vmatprep.subr.bf16.mxu0 0
        %791 = vmatpush1.bf16.xpose.msra.mxu0 0
        %792 = vmatprep.subr.bf16.mxu0 0
        %793 = vmatpush1.bf16.xpose.msra.mxu0 0
        %794 = vmatprep.subr.bf16.mxu0 0
        %795 = vmatpush1.bf16.xpose.msra.mxu0 %v778
        %796 = vmatprep.subr.bf16.mxu0 0
        %797 = vmatpush2.bf16.xpose.msra.mxu0 0
        %798 = vmatprep.subr.bf16.mxu0 0
        %799 = vmatpush2.bf16.xpose.msra.mxu0 0
        %800 = vmatprep.subr.bf16.mxu0 0
        %801 = vmatpush2.bf16.xpose.msra.mxu0 0
        %802 = vmatprep.subr.bf16.mxu0 0
        %803 = vmatpush2.bf16.xpose.msra.mxu0 0
        %804 = vmatprep.subr.bf16.mxu0 0
        %805 = vmatpush2.bf16.xpose.msra.mxu0 0
        %806 = vmatprep.subr.bf16.mxu0 0
        %807 = vmatpush2.bf16.xpose.msra.mxu0 0
        %808 = vmatprep.subr.bf16.mxu0 0
        %809 = vmatpush2.bf16.xpose.msra.mxu0 0
        %810 = vmatprep.subr.bf16.mxu0 0
        %811 = vmatpush2.bf16.xpose.msra.mxu0 0
        %812 = vmatprep.mubr.bf16.mxu0 0
        %813 = vmatmul.mubr.bf16.gmra.mxu0 %v775
        %v814 = vpop.f32.mrf.mxu0
        %v815 = vadd.f32 0.0, %v814
        %v816 = vpop.f32.mrf.mxu0
        %v817 = vpop.f32.mrf.mxu0
        %v818 = vadd.f32 0.0, %v817
        %v819 = vpop.f32.mrf.mxu0
        %820 = vdwg.mxu0
        %822 = vrot.lane.b32.xlu0 %v744, 64
        %v823 = vpop.permute.xlu0 %822
        %v825 = vsel %vm642, %v720, 0
        %v828 = vsel %vm642, %v823, 0
        %830 = vmatprep.subr.bf16.mxu0 0
        %831 = vmatpush1.bf16.xpose.msra.mxu0 0
        %832 = vmatprep.subr.bf16.mxu0 0
        %833 = vmatpush1.bf16.xpose.msra.mxu0 0
        %834 = vmatprep.subr.bf16.mxu0 0
        %835 = vmatpush1.bf16.xpose.msra.mxu0 0
        %836 = vmatprep.subr.bf16.mxu0 0
        %837 = vmatpush1.bf16.xpose.msra.mxu0 0
        %838 = vmatprep.subr.bf16.mxu0 0
        %839 = vmatpush1.bf16.xpose.msra.mxu0 0
        %840 = vmatprep.subr.bf16.mxu0 0
        %841 = vmatpush1.bf16.xpose.msra.mxu0 0
        %842 = vmatprep.subr.bf16.mxu0 0
        %843 = vmatpush1.bf16.xpose.msra.mxu0 0
        %844 = vmatprep.subr.bf16.mxu0 0
        %845 = vmatpush1.bf16.xpose.msra.mxu0 %v828
        %846 = vmatprep.subr.bf16.mxu0 0
        %847 = vmatpush2.bf16.xpose.msra.mxu0 0
        %848 = vmatprep.subr.bf16.mxu0 0
        %849 = vmatpush2.bf16.xpose.msra.mxu0 0
        %850 = vmatprep.subr.bf16.mxu0 0
        %851 = vmatpush2.bf16.xpose.msra.mxu0 0
        %852 = vmatprep.subr.bf16.mxu0 0
        %853 = vmatpush2.bf16.xpose.msra.mxu0 0
        %854 = vmatprep.subr.bf16.mxu0 0
        %855 = vmatpush2.bf16.xpose.msra.mxu0 0
        %856 = vmatprep.subr.bf16.mxu0 0
        %857 = vmatpush2.bf16.xpose.msra.mxu0 0
        %858 = vmatprep.subr.bf16.mxu0 0
        %859 = vmatpush2.bf16.xpose.msra.mxu0 0
        %860 = vmatprep.subr.bf16.mxu0 0
        %861 = vmatpush2.bf16.xpose.msra.mxu0 0
        %862 = vmatprep.mubr.bf16.mxu0 0
        %863 = vmatmul.mubr.bf16.gmra.mxu0 %v825
        %v864 = vpop.f32.mrf.mxu0
        %v865 = vadd.f32 0.0, %v864
        %v866 = vpop.f32.mrf.mxu0
        %v867 = vpop.f32.mrf.mxu0
        %v868 = vadd.f32 0.0, %v867
        %v869 = vpop.f32.mrf.mxu0
        %870 = vdwg.mxu0
        %872 = vrot.lane.b32.xlu0 %v745, 64
        %v873 = vpop.permute.xlu0 %872
        %v875 = vsel %vm642, %v721, 0
        %v878 = vsel %vm642, %v873, 0
        %880 = vmatprep.subr.bf16.mxu0 0
        %881 = vmatpush1.bf16.xpose.msra.mxu0 0
        %882 = vmatprep.subr.bf16.mxu0 0
        %883 = vmatpush1.bf16.xpose.msra.mxu0 0
        %884 = vmatprep.subr.bf16.mxu0 0
        %885 = vmatpush1.bf16.xpose.msra.mxu0 0
        %886 = vmatprep.subr.bf16.mxu0 0
        %887 = vmatpush1.bf16.xpose.msra.mxu0 0
        %888 = vmatprep.subr.bf16.mxu0 0
        %889 = vmatpush1.bf16.xpose.msra.mxu0 0
        %890 = vmatprep.subr.bf16.mxu0 0
        %891 = vmatpush1.bf16.xpose.msra.mxu0 0
        %892 = vmatprep.subr.bf16.mxu0 0
        %893 = vmatpush1.bf16.xpose.msra.mxu0 0
        %894 = vmatprep.subr.bf16.mxu0 0
        %895 = vmatpush1.bf16.xpose.msra.mxu0 %v878
        %896 = vmatprep.subr.bf16.mxu0 0
        %897 = vmatpush2.bf16.xpose.msra.mxu0 0
        %898 = vmatprep.subr.bf16.mxu0 0
        %899 = vmatpush2.bf16.xpose.msra.mxu0 0
        %900 = vmatprep.subr.bf16.mxu0 0
        %901 = vmatpush2.bf16.xpose.msra.mxu0 0
        %902 = vmatprep.subr.bf16.mxu0 0
        %903 = vmatpush2.bf16.xpose.msra.mxu0 0
        %904 = vmatprep.subr.bf16.mxu0 0
        %905 = vmatpush2.bf16.xpose.msra.mxu0 0
        %906 = vmatprep.subr.bf16.mxu0 0
        %907 = vmatpush2.bf16.xpose.msra.mxu0 0
        %908 = vmatprep.subr.bf16.mxu0 0
        %909 = vmatpush2.bf16.xpose.msra.mxu0 0
        %910 = vmatprep.subr.bf16.mxu0 0
        %911 = vmatpush2.bf16.xpose.msra.mxu0 0
        %912 = vmatprep.mubr.bf16.mxu0 0
        %913 = vmatmul.mubr.bf16.gmra.mxu0 %v875
        %v914 = vpop.f32.mrf.mxu0
        %v915 = vadd.f32 0.0, %v914
        %v916 = vpop.f32.mrf.mxu0
        %v917 = vpop.f32.mrf.mxu0
        %v918 = vadd.f32 0.0, %v917
        %v919 = vpop.f32.mrf.mxu0
        %920 = vdwg.mxu0
        %922 = vrot.lane.b32.xlu0 %v746, 64
        %v923 = vpop.permute.xlu0 %922
        %v925 = vsel %vm642, %v722, 0
        %v928 = vsel %vm642, %v923, 0
        %930 = vmatprep.subr.bf16.mxu0 0
        %931 = vmatpush1.bf16.xpose.msra.mxu0 0
        %932 = vmatprep.subr.bf16.mxu0 0
        %933 = vmatpush1.bf16.xpose.msra.mxu0 0
        %934 = vmatprep.subr.bf16.mxu0 0
        %935 = vmatpush1.bf16.xpose.msra.mxu0 0
        %936 = vmatprep.subr.bf16.mxu0 0
        %937 = vmatpush1.bf16.xpose.msra.mxu0 0
        %938 = vmatprep.subr.bf16.mxu0 0
        %939 = vmatpush1.bf16.xpose.msra.mxu0 0
        %940 = vmatprep.subr.bf16.mxu0 0
        %941 = vmatpush1.bf16.xpose.msra.mxu0 0
        %942 = vmatprep.subr.bf16.mxu0 0
        %943 = vmatpush1.bf16.xpose.msra.mxu0 0
        %944 = vmatprep.subr.bf16.mxu0 0
        %945 = vmatpush1.bf16.xpose.msra.mxu0 %v928
        %946 = vmatprep.subr.bf16.mxu0 0
        %947 = vmatpush2.bf16.xpose.msra.mxu0 0
        %948 = vmatprep.subr.bf16.mxu0 0
        %949 = vmatpush2.bf16.xpose.msra.mxu0 0
        %950 = vmatprep.subr.bf16.mxu0 0
        %951 = vmatpush2.bf16.xpose.msra.mxu0 0
        %952 = vmatprep.subr.bf16.mxu0 0
        %953 = vmatpush2.bf16.xpose.msra.mxu0 0
        %954 = vmatprep.subr.bf16.mxu0 0
        %955 = vmatpush2.bf16.xpose.msra.mxu0 0
        %956 = vmatprep.subr.bf16.mxu0 0
        %957 = vmatpush2.bf16.xpose.msra.mxu0 0
        %958 = vmatprep.subr.bf16.mxu0 0
        %959 = vmatpush2.bf16.xpose.msra.mxu0 0
        %960 = vmatprep.subr.bf16.mxu0 0
        %961 = vmatpush2.bf16.xpose.msra.mxu0 0
        %962 = vmatprep.mubr.bf16.mxu0 0
        %963 = vmatmul.mubr.bf16.gmra.mxu0 %v925
        %v964 = vpop.f32.mrf.mxu0
        %v965 = vadd.f32 0.0, %v964
        %v966 = vpop.f32.mrf.mxu0
        %v967 = vpop.f32.mrf.mxu0
        %v968 = vadd.f32 0.0, %v967
        %v969 = vpop.f32.mrf.mxu0
        %970 = vdwg.mxu0
        %v971 = vsel %vm642, %v815, -inf
        %972 = vmax.xlane.f32.xlu0 %v971
        %v973 = vpop.xlane.xlu0 %972
        %v974 = vsel %vm642, %v818, -inf
        %975 = vmax.xlane.f32.xlu0 %v974
        %v976 = vpop.xlane.xlu0 %975
        %v977 = vsel %vm642, %v865, -inf
        %978 = vmax.xlane.f32.xlu0 %v977
        %v979 = vpop.xlane.xlu0 %978
        %v980 = vsel %vm642, %v868, -inf
        %981 = vmax.xlane.f32.xlu0 %v980
        %v982 = vpop.xlane.xlu0 %981
        %v983 = vsel %vm642, %v915, -inf
        %984 = vmax.xlane.f32.xlu0 %v983
        %v985 = vpop.xlane.xlu0 %984
        %v986 = vsel %vm642, %v918, -inf
        %987 = vmax.xlane.f32.xlu0 %v986
        %v988 = vpop.xlane.xlu0 %987
        %v989 = vsel %vm642, %v965, -inf
        %990 = vmax.xlane.f32.xlu0 %v989
        %v991 = vpop.xlane.xlu0 %990
        %v992 = vsel %vm642, %v968, -inf
        %993 = vmax.xlane.f32.xlu0 %v992
        %v994 = vpop.xlane.xlu0 %993
        %v995 = vsub.f32 %v815, %v973
        %v996 = vsub.f32 %v818, %v976
        %v997 = vsub.f32 %v865, %v979
        %v998 = vsub.f32 %v868, %v982
        %v999 = vsub.f32 %v915, %v985
        %v1000 = vsub.f32 %v918, %v988
        %v1001 = vsub.f32 %v965, %v991
        %v1002 = vsub.f32 %v968, %v994
        %v1003 = vmul.f32 %v995, 1.442695
        %v1004 = vpow.pop %v1003
        %v1005 = vmul.f32 %v996, 1.442695
        %v1006 = vpow.pop %v1005
        %v1007 = vmul.f32 %v997, 1.442695
        %v1008 = vpow.pop %v1007
        %v1009 = vmul.f32 %v998, 1.442695
        %v1010 = vpow.pop %v1009
        %v1011 = vmul.f32 %v999, 1.442695
        %v1012 = vpow.pop %v1011
        %v1013 = vmul.f32 %v1000, 1.442695
        %v1014 = vpow.pop %v1013
        %v1015 = vmul.f32 %v1001, 1.442695
        %v1016 = vpow.pop %v1015
        %v1017 = vmul.f32 %v1002, 1.442695
        %v1018 = vpow.pop %v1017
        %v1019 = vsel %vm642, %v1004, 0.0
        %1020 = vadd.xlane.f32.xlu0 %v1019
        %v1021 = vpop.xlane.xlu0 %1020
        %v1022 = vsel %vm642, %v1006, 0.0
        %1023 = vadd.xlane.f32.xlu0 %v1022
        %v1024 = vpop.xlane.xlu0 %1023
        %v1025 = vsel %vm642, %v1008, 0.0
        %1026 = vadd.xlane.f32.xlu0 %v1025
        %v1027 = vpop.xlane.xlu0 %1026
        %v1028 = vsel %vm642, %v1010, 0.0
        %1029 = vadd.xlane.f32.xlu0 %v1028
        %v1030 = vpop.xlane.xlu0 %1029
        %v1031 = vsel %vm642, %v1012, 0.0
        %1032 = vadd.xlane.f32.xlu0 %v1031
        %v1033 = vpop.xlane.xlu0 %1032
        %v1034 = vsel %vm642, %v1014, 0.0
        %1035 = vadd.xlane.f32.xlu0 %v1034
        %v1036 = vpop.xlane.xlu0 %1035
        %v1037 = vsel %vm642, %v1016, 0.0
        %1038 = vadd.xlane.f32.xlu0 %v1037
        %v1039 = vpop.xlane.xlu0 %1038
        %v1040 = vsel %vm642, %v1018, 0.0
        %1041 = vadd.xlane.f32.xlu0 %v1040
        %v1042 = vpop.xlane.xlu0 %1041
        %v1043 = vrcp.pop %v1021
        %v1044 = vrcp.pop %v1024
        %v1045 = vrcp.pop %v1027
        %v1046 = vrcp.pop %v1030
        %v1047 = vrcp.pop %v1033
        %v1048 = vrcp.pop %v1036
        %v1049 = vrcp.pop %v1039
        %v1050 = vrcp.pop %v1042
        %v1051 = vpack.c.bf16 %v1006, %v1004
        %v1052 = vpack.c.bf16 %v1010, %v1008
        %v1053 = vpack.c.bf16 %v1014, %v1012
        %v1054 = vpack.c.bf16 %v1018, %v1016
        %v1056 = vsel %vm642, %v1051, 0
        %1058 = vmatprep.subr.bf16.mxu0 0
        %1059 = vmatpush1.bf16.msra.mxu0 0
        %1060 = vmatprep.subr.bf16.mxu0 0
        %1061 = vmatpush1.bf16.msra.mxu0 0
        %1062 = vmatprep.subr.bf16.mxu0 0
        %1063 = vmatpush1.bf16.msra.mxu0 0
        %1064 = vmatprep.subr.bf16.mxu0 0
        %1065 = vmatpush1.bf16.msra.mxu0 0
        %1066 = vmatprep.subr.bf16.mxu0 0
        %1067 = vmatpush1.bf16.msra.mxu0 0
        %1068 = vmatprep.subr.bf16.mxu0 0
        %1069 = vmatpush1.bf16.msra.mxu0 0
        %1070 = vmatprep.subr.bf16.mxu0 0
        %1071 = vmatpush1.bf16.msra.mxu0 0
        %1072 = vmatprep.subr.bf16.mxu0 0
        %1073 = vmatpush1.bf16.msra.mxu0 %v767
        %1074 = vmatprep.subr.bf16.mxu0 0
        %1075 = vmatpush2.bf16.msra.mxu0 0
        %1076 = vmatprep.subr.bf16.mxu0 0
        %1077 = vmatpush2.bf16.msra.mxu0 0
        %1078 = vmatprep.subr.bf16.mxu0 0
        %1079 = vmatpush2.bf16.msra.mxu0 0
        %1080 = vmatprep.subr.bf16.mxu0 0
        %1081 = vmatpush2.bf16.msra.mxu0 0
        %1082 = vmatprep.subr.bf16.mxu0 0
        %1083 = vmatpush2.bf16.msra.mxu0 0
        %1084 = vmatprep.subr.bf16.mxu0 0
        %1085 = vmatpush2.bf16.msra.mxu0 0
        %1086 = vmatprep.subr.bf16.mxu0 0
        %1087 = vmatpush2.bf16.msra.mxu0 0
        %1088 = vmatprep.subr.bf16.mxu0 0
        %1089 = vmatpush2.bf16.msra.mxu0 0
        %1090 = vmatprep.mubr.bf16.mxu0 0
        %1091 = vmatmul.mubr.bf16.gmra.mxu0 %v1056
        %v1092 = vpop.f32.mrf.mxu0
        %v1093 = vadd.f32 0.0, %v1092
        %v1094 = vpop.f32.mrf.mxu0
        %v1095 = vpop.f32.mrf.mxu0
        %v1096 = vadd.f32 0.0, %v1095
        %v1097 = vpop.f32.mrf.mxu0
        %1098 = vdwg.mxu0
        %v1100 = vsel %vm642, %v1052, 0
        %1102 = vmatprep.subr.bf16.mxu0 0
        %1103 = vmatpush1.bf16.msra.mxu0 0
        %1104 = vmatprep.subr.bf16.mxu0 0
        %1105 = vmatpush1.bf16.msra.mxu0 0
        %1106 = vmatprep.subr.bf16.mxu0 0
        %1107 = vmatpush1.bf16.msra.mxu0 0
        %1108 = vmatprep.subr.bf16.mxu0 0
        %1109 = vmatpush1.bf16.msra.mxu0 0
        %1110 = vmatprep.subr.bf16.mxu0 0
        %1111 = vmatpush1.bf16.msra.mxu0 0
        %1112 = vmatprep.subr.bf16.mxu0 0
        %1113 = vmatpush1.bf16.msra.mxu0 0
        %1114 = vmatprep.subr.bf16.mxu0 0
        %1115 = vmatpush1.bf16.msra.mxu0 0
        %1116 = vmatprep.subr.bf16.mxu0 0
        %1117 = vmatpush1.bf16.msra.mxu0 %v768
        %1118 = vmatprep.subr.bf16.mxu0 0
        %1119 = vmatpush2.bf16.msra.mxu0 0
        %1120 = vmatprep.subr.bf16.mxu0 0
        %1121 = vmatpush2.bf16.msra.mxu0 0
        %1122 = vmatprep.subr.bf16.mxu0 0
        %1123 = vmatpush2.bf16.msra.mxu0 0
        %1124 = vmatprep.subr.bf16.mxu0 0
        %1125 = vmatpush2.bf16.msra.mxu0 0
        %1126 = vmatprep.subr.bf16.mxu0 0
        %1127 = vmatpush2.bf16.msra.mxu0 0
        %1128 = vmatprep.subr.bf16.mxu0 0
        %1129 = vmatpush2.bf16.msra.mxu0 0
        %1130 = vmatprep.subr.bf16.mxu0 0
        %1131 = vmatpush2.bf16.msra.mxu0 0
        %1132 = vmatprep.subr.bf16.mxu0 0
        %1133 = vmatpush2.bf16.msra.mxu0 0
        %1134 = vmatprep.mubr.bf16.mxu0 0
        %1135 = vmatmul.mubr.bf16.gmra.mxu0 %v1100
        %v1136 = vpop.f32.mrf.mxu0
        %v1137 = vadd.f32 0.0, %v1136
        %v1138 = vpop.f32.mrf.mxu0
        %v1139 = vpop.f32.mrf.mxu0
        %v1140 = vadd.f32 0.0, %v1139
        %v1141 = vpop.f32.mrf.mxu0
        %1142 = vdwg.mxu0
        %v1144 = vsel %vm642, %v1053, 0
        %1146 = vmatprep.subr.bf16.mxu0 0
        %1147 = vmatpush1.bf16.msra.mxu0 0
        %1148 = vmatprep.subr.bf16.mxu0 0
        %1149 = vmatpush1.bf16.msra.mxu0 0
        %1150 = vmatprep.subr.bf16.mxu0 0
        %1151 = vmatpush1.bf16.msra.mxu0 0
        %1152 = vmatprep.subr.bf16.mxu0 0
        %1153 = vmatpush1.bf16.msra.mxu0 0
        %1154 = vmatprep.subr.bf16.mxu0 0
        %1155 = vmatpush1.bf16.msra.mxu0 0
        %1156 = vmatprep.subr.bf16.mxu0 0
        %1157 = vmatpush1.bf16.msra.mxu0 0
        %1158 = vmatprep.subr.bf16.mxu0 0
        %1159 = vmatpush1.bf16.msra.mxu0 0
        %1160 = vmatprep.subr.bf16.mxu0 0
        %1161 = vmatpush1.bf16.msra.mxu0 %v769
        %1162 = vmatprep.subr.bf16.mxu0 0
        %1163 = vmatpush2.bf16.msra.mxu0 0
        %1164 = vmatprep.subr.bf16.mxu0 0
        %1165 = vmatpush2.bf16.msra.mxu0 0
        %1166 = vmatprep.subr.bf16.mxu0 0
        %1167 = vmatpush2.bf16.msra.mxu0 0
        %1168 = vmatprep.subr.bf16.mxu0 0
        %1169 = vmatpush2.bf16.msra.mxu0 0
        %1170 = vmatprep.subr.bf16.mxu0 0
        %1171 = vmatpush2.bf16.msra.mxu0 0
        %1172 = vmatprep.subr.bf16.mxu0 0
        %1173 = vmatpush2.bf16.msra.mxu0 0
        %1174 = vmatprep.subr.bf16.mxu0 0
        %1175 = vmatpush2.bf16.msra.mxu0 0
        %1176 = vmatprep.subr.bf16.mxu0 0
        %1177 = vmatpush2.bf16.msra.mxu0 0
        %1178 = vmatprep.mubr.bf16.mxu0 0
        %1179 = vmatmul.mubr.bf16.gmra.mxu0 %v1144
        %v1180 = vpop.f32.mrf.mxu0
        %v1181 = vadd.f32 0.0, %v1180
        %v1182 = vpop.f32.mrf.mxu0
        %v1183 = vpop.f32.mrf.mxu0
        %v1184 = vadd.f32 0.0, %v1183
        %v1185 = vpop.f32.mrf.mxu0
        %1186 = vdwg.mxu0
        %v1188 = vsel %vm642, %v1054, 0
        %1190 = vmatprep.subr.bf16.mxu0 0
        %1191 = vmatpush1.bf16.msra.mxu0 0
        %1192 = vmatprep.subr.bf16.mxu0 0
        %1193 = vmatpush1.bf16.msra.mxu0 0
        %1194 = vmatprep.subr.bf16.mxu0 0
        %1195 = vmatpush1.bf16.msra.mxu0 0
        %1196 = vmatprep.subr.bf16.mxu0 0
        %1197 = vmatpush1.bf16.msra.mxu0 0
        %1198 = vmatprep.subr.bf16.mxu0 0
        %1199 = vmatpush1.bf16.msra.mxu0 0
        %1200 = vmatprep.subr.bf16.mxu0 0
        %1201 = vmatpush1.bf16.msra.mxu0 0
        %1202 = vmatprep.subr.bf16.mxu0 0
        %1203 = vmatpush1.bf16.msra.mxu0 0
        %1204 = vmatprep.subr.bf16.mxu0 0
        %1205 = vmatpush1.bf16.msra.mxu0 %v770
        %1206 = vmatprep.subr.bf16.mxu0 0
        %1207 = vmatpush2.bf16.msra.mxu0 0
        %1208 = vmatprep.subr.bf16.mxu0 0
        %1209 = vmatpush2.bf16.msra.mxu0 0
        %1210 = vmatprep.subr.bf16.mxu0 0
        %1211 = vmatpush2.bf16.msra.mxu0 0
        %1212 = vmatprep.subr.bf16.mxu0 0
        %1213 = vmatpush2.bf16.msra.mxu0 0
        %1214 = vmatprep.subr.bf16.mxu0 0
        %1215 = vmatpush2.bf16.msra.mxu0 0
        %1216 = vmatprep.subr.bf16.mxu0 0
        %1217 = vmatpush2.bf16.msra.mxu0 0
        %1218 = vmatprep.subr.bf16.mxu0 0
        %1219 = vmatpush2.bf16.msra.mxu0 0
        %1220 = vmatprep.subr.bf16.mxu0 0
        %1221 = vmatpush2.bf16.msra.mxu0 0
        %1222 = vmatprep.mubr.bf16.mxu0 0
        %1223 = vmatmul.mubr.bf16.gmra.mxu0 %v1188
        %v1224 = vpop.f32.mrf.mxu0
        %v1225 = vadd.f32 0.0, %v1224
        %v1226 = vpop.f32.mrf.mxu0
        %v1227 = vpop.f32.mrf.mxu0
        %v1228 = vadd.f32 0.0, %v1227
        %v1229 = vpop.f32.mrf.mxu0
        %1230 = vdwg.mxu0
        %v1231 = vmul.f32 %v1093, %v1043
        %v1232 = vmul.f32 %v1096, %v1044
        %v1233 = vmul.f32 %v1137, %v1045
        %v1234 = vmul.f32 %v1140, %v1046
        %v1235 = vmul.f32 %v1181, %v1047
        %v1236 = vmul.f32 %v1184, %v1048
        %v1237 = vmul.f32 %v1225, %v1049
        %v1238 = vmul.f32 %v1228, %v1050
        %v1239 = vpack.c.bf16 %v1232, %v1231
        %v1240 = vpack.c.bf16 %v1234, %v1233
        %v1241 = vpack.c.bf16 %v1236, %v1235
        %v1242 = vpack.c.bf16 %v1238, %v1237
        %v1244 = vunpack.c.l.b16 %v1239
        %v1245 = vunpack.c.h.b16 %v1239
        %v1246 = vpack.c.b16 %v1244, %v1244
        %v1247 = vpack.c.b16 %v1245, %v1245
        %vm1250 = vcmask 125952
        %1251 = vst.msk [vmem:[#allocation2] sm:$0xf] %vm1250, %v1246
        %1252 = vst.msk [vmem:[#allocation2 + $0x4] sm:$0xf] %vm1250, %v1247
        %v1254 = vunpack.c.l.b16 %v1240
        %v1255 = vunpack.c.h.b16 %v1240
        %v1256 = vpack.c.b16 %v1254, %v1254
        %v1257 = vpack.c.b16 %v1255, %v1255
        %1258 = vrot.lane.b32.xlu0 %v1256, 16
        %v1259 = vpop.permute.xlu0 %1258
        %1260 = vrot.lane.b32.xlu0 %v1257, 16
        %v1261 = vpop.permute.xlu0 %1260
        %vm1264 = vcmask 257152
        %1265 = vst.msk [vmem:[#allocation2] sm:$0xf] %vm1264, %v1259
        %1266 = vst.msk [vmem:[#allocation2 + $0x4] sm:$0xf] %vm1264, %v1261
        %v1268 = vunpack.c.l.b16 %v1241
        %v1269 = vunpack.c.h.b16 %v1241
        %v1270 = vpack.c.b16 %v1268, %v1268
        %v1271 = vpack.c.b16 %v1269, %v1269
        %1272 = vrot.lane.b32.xlu0 %v1270, 32
        %v1273 = vpop.permute.xlu0 %1272
        %1274 = vrot.lane.b32.xlu0 %v1271, 32
        %v1275 = vpop.permute.xlu0 %1274
        %vm1278 = vcmask 388352
        %1279 = vst.msk [vmem:[#allocation2] sm:$0xf] %vm1278, %v1273
        %1280 = vst.msk [vmem:[#allocation2 + $0x4] sm:$0xf] %vm1278, %v1275
        %v1282 = vunpack.c.l.b16 %v1242
        %v1283 = vunpack.c.h.b16 %v1242
        %v1284 = vpack.c.b16 %v1282, %v1282
        %v1285 = vpack.c.b16 %v1283, %v1283
        %1286 = vrot.lane.b32.xlu0 %v1284, 48
        %v1287 = vpop.permute.xlu0 %1286
        %1288 = vrot.lane.b32.xlu0 %v1285, 48
        %v1289 = vpop.permute.xlu0 %1288
        %vm1292 = vcmask 519552
        %1293 = vst.msk [vmem:[#allocation2] sm:$0xf] %vm1292, %v1287
        %1294 = vst.msk [vmem:[#allocation2 + $0x4] sm:$0xf] %vm1292, %v1289
        %v1295 = vld [vmem:[#allocation2] sm:$0xf]
        %v1296 = vld [vmem:[#allocation2 + $0x4] sm:$0xf]
        %v1297 = vld [vmem:[#allocation8] sm:$0xf]
        %v1298 = vld [vmem:[#allocation8 + $0x4] sm:$0xf]
        %v1299 = vld [vmem:[#allocation8 + $0x8] sm:$0xf]
        %v1300 = vld [vmem:[#allocation8 + $0xc] sm:$0xf]
        %v1301 = vld [vmem:[#allocation8 + $0x10] sm:$0xf]
        %v1302 = vld [vmem:[#allocation8 + $0x14] sm:$0xf]
        %v1303 = vld [vmem:[#allocation8 + $0x18] sm:$0xf]
        %v1304 = vld [vmem:[#allocation8 + $0x1c] sm:$0xf]
        %v1306 = vlaneseq
        %v1307 = vshrl.u32 %v1306, 7
        %v1308 = vsub.s32 0, %v1307
        %v1309 = vrot.slane %v488, %v1308
        %v1313 = vunpack.c.l.b16 %v1295
        %v1314 = vunpack.c.l.b16 %v1296
        %v1315 = vpack.c.b16 %v1314, %v1313
        %v1324 = vunpack.c.l.b16 %v1297
        %v1325 = vunpack.c.l.b16 %v1298
        %v1326 = vunpack.c.l.b16 %v1299
        %v1327 = vunpack.c.l.b16 %v1300
        %v1328 = vunpack.c.l.b16 %v1301
        %v1329 = vunpack.c.l.b16 %v1302
        %v1330 = vunpack.c.l.b16 %v1303
        %v1331 = vunpack.c.l.b16 %v1304
        %v1332 = vpack.c.b16 %v1325, %v1324
        %v1333 = vpack.c.b16 %v1327, %v1326
        %v1334 = vpack.c.b16 %v1329, %v1328
        %v1335 = vpack.c.b16 %v1331, %v1330
        %v1341 = vsel %vm491, %v1315, 0
        %1343 = vmatprep.subr.bf16.mxu0 0
        %1344 = vmatpush1.bf16.msra.mxu0 0
        %1345 = vmatprep.subr.bf16.mxu0 0
        %1346 = vmatpush1.bf16.msra.mxu0 0
        %1347 = vmatprep.subr.bf16.mxu0 0
        %1348 = vmatpush1.bf16.msra.mxu0 0
        %1349 = vmatprep.subr.bf16.mxu0 0
        %1350 = vmatpush1.bf16.msra.mxu0 0
        %1351 = vmatprep.subr.bf16.mxu0 0
        %1352 = vmatpush1.bf16.msra.mxu0 %v1335
        %1353 = vmatprep.subr.bf16.mxu0 0
        %1354 = vmatpush1.bf16.msra.mxu0 %v1334
        %1355 = vmatprep.subr.bf16.mxu0 0
        %1356 = vmatpush1.bf16.msra.mxu0 %v1333
        %1357 = vmatprep.subr.bf16.mxu0 0
        %1358 = vmatpush1.bf16.msra.mxu0 %v1332
        %1359 = vmatprep.subr.bf16.mxu0 0
        %1360 = vmatpush2.bf16.msra.mxu0 0
        %1361 = vmatprep.subr.bf16.mxu0 0
        %1362 = vmatpush2.bf16.msra.mxu0 0
        %1363 = vmatprep.subr.bf16.mxu0 0
        %1364 = vmatpush2.bf16.msra.mxu0 0
        %1365 = vmatprep.subr.bf16.mxu0 0
        %1366 = vmatpush2.bf16.msra.mxu0 0
        %1367 = vmatprep.subr.bf16.mxu0 0
        %1368 = vmatpush2.bf16.msra.mxu0 0
        %1369 = vmatprep.subr.bf16.mxu0 0
        %1370 = vmatpush2.bf16.msra.mxu0 0
        %1371 = vmatprep.subr.bf16.mxu0 0
        %1372 = vmatpush2.bf16.msra.mxu0 0
        %1373 = vmatprep.subr.bf16.mxu0 0
        %1374 = vmatpush2.bf16.msra.mxu0 0
        %1375 = vmatprep.mubr.bf16.mxu0 0
        %1376 = vmatmul.mubr.bf16.gmra.mxu0 %v1341
        %v1377 = vpop.f32.mrf.mxu0
        %v1378 = vadd.f32 %v1309, %v1377
        %v1379 = vpop.f32.mrf.mxu0
        %v1380 = vpop.f32.mrf.mxu0
        %v1381 = vadd.f32 %v1309, %v1380
        %v1382 = vpop.f32.mrf.mxu0
        %1383 = vdwg.mxu0
        %v1384 = vadd.f32 %v482, %v1378
        %v1385 = vadd.f32 %v483, %v1381
        %v1386 = vsel %vm491, %v1384, 0.0
        %1387 = vadd.xlane.f32.xlu0 %v1386
        %v1388 = vpop.xlane.xlu0 %1387
        %v1389 = vsel %vm491, %v1385, 0.0
        %1390 = vadd.xlane.f32.xlu0 %v1389
        %v1391 = vpop.xlane.xlu0 %1390
        %v1392 = vmul.f32 %v1388, %v498
        %v1393 = vmul.f32 %v1391, %v498
        %v1394 = vsub.f32 %v1384, %v1392
        %v1395 = vsub.f32 %v1385, %v1393
        %v1396 = vmul.f32 %v1394, %v1394
        %v1397 = vmul.f32 %v1395, %v1395
        %v1398 = vsel %vm491, %v1396, 0.0
        %1399 = vadd.xlane.f32.xlu0 %v1398
        %v1400 = vpop.xlane.xlu0 %1399
        %v1401 = vsel %vm491, %v1397, 0.0
        %1402 = vadd.xlane.f32.xlu0 %v1401
        %v1403 = vpop.xlane.xlu0 %1402
        %v1404 = vmul.f32 %v1400, %v498
        %v1405 = vmul.f32 %v1403, %v498
        %v1406 = vadd.f32 %v1404, 1e-05
        %v1407 = vadd.f32 %v1405, 1e-05
        %v1408 = vrsqrt.pop %v1406
        %v1409 = vrsqrt.pop %v1407
        %v1410 = vmul.f32 %v1394, %v1408
        %v1411 = vmul.f32 %v1395, %v1409
        %v1413 = vlaneseq
        %v1414 = vshrl.u32 %v1413, 7
        %v1415 = vsub.s32 0, %v1414
        %v1416 = vrot.slane %v486, %v1415
        %v1418 = vmul.f32 %v1410, %v1416
        %v1419 = vmul.f32 %v1411, %v1416
        %v1421 = vlaneseq
        %v1422 = vshrl.u32 %v1421, 7
        %v1423 = vsub.s32 0, %v1422
        %v1424 = vrot.slane %v487, %v1423
        %v1426 = vadd.f32 %v1418, %v1424
        %v1427 = vadd.f32 %v1419, %v1424
        %v1428 = vpack.c.bf16 %v1427, %v1426
        %v1429 = vld [vmem:[%s9] sm:$0xff]
        %v1430 = vld [vmem:[%s9 + $0x8] sm:$0xff]
        %v1431 = vld [vmem:[%s9 + $0x10] sm:$0xff]
        %v1432 = vld [vmem:[%s9 + $0x18] sm:$0xff]
        %v1433 = vld [vmem:[%s9 + $0x20] sm:$0xff]
        %v1434 = vld [vmem:[%s9 + $0x28] sm:$0xff]
        %v1435 = vld [vmem:[%s9 + $0x30] sm:$0xff]
        %v1436 = vld [vmem:[%s9 + $0x38] sm:$0xff]
        %v1438 = vlaneseq
        %v1439 = vshrl.u32 %v1438, 7
        %v1440 = vsub.s32 0, %v1439
        %v1441 = vrot.slane %v489, %v1440
        %v1442 = vlaneseq
        %v1443 = vshrl.u32 %v1442, 7
        %v1444 = vsub.s32 1, %v1443
        %v1445 = vrot.slane %v489, %v1444
        %v1456 = vunpack.c.l.b16 %v1429
        %v1457 = vunpack.c.h.b16 %v1429
        %v1458 = vunpack.c.l.b16 %v1430
        %v1459 = vunpack.c.h.b16 %v1430
        %v1460 = vunpack.c.l.b16 %v1431
        %v1461 = vunpack.c.h.b16 %v1431
        %v1462 = vunpack.c.l.b16 %v1432
        %v1463 = vunpack.c.h.b16 %v1432
        %v1464 = vunpack.c.l.b16 %v1433
        %v1465 = vunpack.c.h.b16 %v1433
        %v1466 = vunpack.c.l.b16 %v1434
        %v1467 = vunpack.c.h.b16 %v1434
        %v1468 = vunpack.c.l.b16 %v1435
        %v1469 = vunpack.c.h.b16 %v1435
        %v1470 = vunpack.c.l.b16 %v1436
        %v1471 = vunpack.c.h.b16 %v1436
        %v1472 = vpack.c.b16 %v1458, %v1456
        %v1473 = vpack.c.b16 %v1459, %v1457
        %v1474 = vpack.c.b16 %v1462, %v1460
        %v1475 = vpack.c.b16 %v1463, %v1461
        %v1476 = vpack.c.b16 %v1466, %v1464
        %v1477 = vpack.c.b16 %v1467, %v1465
        %v1478 = vpack.c.b16 %v1470, %v1468
        %v1479 = vpack.c.b16 %v1471, %v1469
        %v1489 = vsel %vm491, %v1428, 0
        %1491 = vmatprep.subr.bf16.mxu0 0
        %1492 = vmatpush1.bf16.msra.mxu0 0
        %1493 = vmatprep.subr.bf16.mxu0 0
        %1494 = vmatpush1.bf16.msra.mxu0 0
        %1495 = vmatprep.subr.bf16.mxu0 0
        %1496 = vmatpush1.bf16.msra.mxu0 0
        %1497 = vmatprep.subr.bf16.mxu0 0
        %1498 = vmatpush1.bf16.msra.mxu0 0
        %1499 = vmatprep.subr.bf16.mxu0 %v1479
        %1500 = vmatpush1.bf16.msra.mxu0 %v1478
        %1501 = vmatprep.subr.bf16.mxu0 %v1477
        %1502 = vmatpush1.bf16.msra.mxu0 %v1476
        %1503 = vmatprep.subr.bf16.mxu0 %v1475
        %1504 = vmatpush1.bf16.msra.mxu0 %v1474
        %1505 = vmatprep.subr.bf16.mxu0 %v1473
        %1506 = vmatpush1.bf16.msra.mxu0 %v1472
        %1507 = vmatprep.subr.bf16.mxu0 0
        %1508 = vmatpush2.bf16.msra.mxu0 0
        %1509 = vmatprep.subr.bf16.mxu0 0
        %1510 = vmatpush2.bf16.msra.mxu0 0
        %1511 = vmatprep.subr.bf16.mxu0 0
        %1512 = vmatpush2.bf16.msra.mxu0 0
        %1513 = vmatprep.subr.bf16.mxu0 0
        %1514 = vmatpush2.bf16.msra.mxu0 0
        %1515 = vmatprep.subr.bf16.mxu0 0
        %1516 = vmatpush2.bf16.msra.mxu0 0
        %1517 = vmatprep.subr.bf16.mxu0 0
        %1518 = vmatpush2.bf16.msra.mxu0 0
        %1519 = vmatprep.subr.bf16.mxu0 0
        %1520 = vmatpush2.bf16.msra.mxu0 0
        %1521 = vmatprep.subr.bf16.mxu0 0
        %1522 = vmatpush2.bf16.msra.mxu0 0
        %1523 = vmatprep.mubr.bf16.mxu0 0
        %1524 = vmatmul.mubr.bf16.gmra.mxu0 %v1489
        %v1525 = vpop.f32.mrf.mxu0
        %v1526 = vadd.f32 %v1441, %v1525
        %v1527 = vpop.f32.mrf.mxu0
        %v1528 = vadd.f32 %v1445, %v1527
        %v1529 = vpop.f32.mrf.mxu0
        %v1530 = vadd.f32 %v1441, %v1529
        %v1531 = vpop.f32.mrf.mxu0
        %v1532 = vadd.f32 %v1445, %v1531
        %1533 = vdwg.mxu0
        %v1534 = vmul.f32 %v1526, 0.5
        %v1535 = vmul.f32 %v1528, 0.5
        %v1536 = vmul.f32 %v1530, 0.5
        %v1537 = vmul.f32 %v1532, 0.5
        %v1538 = vmul.f32 %v1526, 0.70710677
        %v1539 = vmul.f32 %v1528, 0.70710677
        %v1540 = vmul.f32 %v1530, 0.70710677
        %v1541 = vmul.f32 %v1532, 0.70710677
        %v1542 = verf.f32.pop %v1538
        %v1543 = verf.f32.pop %v1539
        %v1544 = verf.f32.pop %v1540
        %v1545 = verf.f32.pop %v1541
        %v1546 = vadd.f32 %v1542, 1.0
        %v1547 = vadd.f32 %v1543, 1.0
        %v1548 = vadd.f32 %v1544, 1.0
        %v1549 = vadd.f32 %v1545, 1.0
        %v1550 = vmul.f32 %v1534, %v1546
        %v1551 = vmul.f32 %v1535, %v1547
        %v1552 = vmul.f32 %v1536, %v1548
        %v1553 = vmul.f32 %v1537, %v1549
        %v1554 = vpack.c.bf16 %v1552, %v1550
        %v1555 = vpack.c.bf16 %v1553, %v1551
        %v1556 = vld [vmem:[%s11] sm:$0xf]
        %v1557 = vld [vmem:[%s11 + $0x4] sm:$0xf]
        %v1558 = vld [vmem:[%s11 + $0x8] sm:$0xf]
        %v1559 = vld [vmem:[%s11 + $0xc] sm:$0xf]
        %v1560 = vld [vmem:[%s11 + $0x10] sm:$0xf]
        %v1561 = vld [vmem:[%s11 + $0x14] sm:$0xf]
        %v1562 = vld [vmem:[%s11 + $0x18] sm:$0xf]
        %v1563 = vld [vmem:[%s11 + $0x1c] sm:$0xf]
        %v1564 = vld [vmem:[%s11 + $0x20] sm:$0xf]
        %v1565 = vld [vmem:[%s11 + $0x24] sm:$0xf]
        %v1566 = vld [vmem:[%s11 + $0x28] sm:$0xf]
        %v1567 = vld [vmem:[%s11 + $0x2c] sm:$0xf]
        %v1568 = vld [vmem:[%s11 + $0x30] sm:$0xf]
        %v1569 = vld [vmem:[%s11 + $0x34] sm:$0xf]
        %v1570 = vld [vmem:[%s11 + $0x38] sm:$0xf]
        %v1571 = vld [vmem:[%s11 + $0x3c] sm:$0xf]
        %v1572 = vld [vmem:[%s11 + $0x40] sm:$0xf]
        %v1573 = vld [vmem:[%s11 + $0x44] sm:$0xf]
        %v1574 = vld [vmem:[%s11 + $0x48] sm:$0xf]
        %v1575 = vld [vmem:[%s11 + $0x4c] sm:$0xf]
        %v1576 = vld [vmem:[%s11 + $0x50] sm:$0xf]
        %v1577 = vld [vmem:[%s11 + $0x54] sm:$0xf]
        %v1578 = vld [vmem:[%s11 + $0x58] sm:$0xf]
        %v1579 = vld [vmem:[%s11 + $0x5c] sm:$0xf]
        %v1580 = vld [vmem:[%s11 + $0x60] sm:$0xf]
        %v1581 = vld [vmem:[%s11 + $0x64] sm:$0xf]
        %v1582 = vld [vmem:[%s11 + $0x68] sm:$0xf]
        %v1583 = vld [vmem:[%s11 + $0x6c] sm:$0xf]
        %v1584 = vld [vmem:[%s11 + $0x70] sm:$0xf]
        %v1585 = vld [vmem:[%s11 + $0x74] sm:$0xf]
        %v1586 = vld [vmem:[%s11 + $0x78] sm:$0xf]
        %v1587 = vld [vmem:[%s11 + $0x7c] sm:$0xf]
        %v1589 = vlaneseq
        %v1590 = vshrl.u32 %v1589, 7
        %v1591 = vsub.s32 0, %v1590
        %v1592 = vrot.slane %v490, %v1591
        %v1626 = vunpack.c.l.b16 %v1556
        %v1627 = vunpack.c.l.b16 %v1557
        %v1628 = vunpack.c.l.b16 %v1558
        %v1629 = vunpack.c.l.b16 %v1559
        %v1630 = vunpack.c.l.b16 %v1560
        %v1631 = vunpack.c.l.b16 %v1561
        %v1632 = vunpack.c.l.b16 %v1562
        %v1633 = vunpack.c.l.b16 %v1563
        %v1634 = vunpack.c.l.b16 %v1564
        %v1635 = vunpack.c.l.b16 %v1565
        %v1636 = vunpack.c.l.b16 %v1566
        %v1637 = vunpack.c.l.b16 %v1567
        %v1638 = vunpack.c.l.b16 %v1568
        %v1639 = vunpack.c.l.b16 %v1569
        %v1640 = vunpack.c.l.b16 %v1570
        %v1641 = vunpack.c.l.b16 %v1571
        %v1642 = vunpack.c.l.b16 %v1572
        %v1643 = vunpack.c.l.b16 %v1573
        %v1644 = vunpack.c.l.b16 %v1574
        %v1645 = vunpack.c.l.b16 %v1575
        %v1646 = vunpack.c.l.b16 %v1576
        %v1647 = vunpack.c.l.b16 %v1577
        %v1648 = vunpack.c.l.b16 %v1578
        %v1649 = vunpack.c.l.b16 %v1579
        %v1650 = vunpack.c.l.b16 %v1580
        %v1651 = vunpack.c.l.b16 %v1581
        %v1652 = vunpack.c.l.b16 %v1582
        %v1653 = vunpack.c.l.b16 %v1583
        %v1654 = vunpack.c.l.b16 %v1584
        %v1655 = vunpack.c.l.b16 %v1585
        %v1656 = vunpack.c.l.b16 %v1586
        %v1657 = vunpack.c.l.b16 %v1587
        %v1658 = vpack.c.b16 %v1627, %v1626
        %v1659 = vpack.c.b16 %v1629, %v1628
        %v1660 = vpack.c.b16 %v1631, %v1630
        %v1661 = vpack.c.b16 %v1633, %v1632
        %v1662 = vpack.c.b16 %v1635, %v1634
        %v1663 = vpack.c.b16 %v1637, %v1636
        %v1664 = vpack.c.b16 %v1639, %v1638
        %v1665 = vpack.c.b16 %v1641, %v1640
        %v1666 = vpack.c.b16 %v1643, %v1642
        %v1667 = vpack.c.b16 %v1645, %v1644
        %v1668 = vpack.c.b16 %v1647, %v1646
        %v1669 = vpack.c.b16 %v1649, %v1648
        %v1670 = vpack.c.b16 %v1651, %v1650
        %v1671 = vpack.c.b16 %v1653, %v1652
        %v1672 = vpack.c.b16 %v1655, %v1654
        %v1673 = vpack.c.b16 %v1657, %v1656
        %1690 = vmatprep.subr.bf16.mxu0 0
        %1691 = vmatpush1.bf16.msra.mxu0 %v1665
        %1692 = vmatprep.subr.bf16.mxu0 0
        %1693 = vmatpush1.bf16.msra.mxu0 %v1664
        %1694 = vmatprep.subr.bf16.mxu0 0
        %1695 = vmatpush1.bf16.msra.mxu0 %v1663
        %1696 = vmatprep.subr.bf16.mxu0 0
        %1697 = vmatpush1.bf16.msra.mxu0 %v1662
        %1698 = vmatprep.subr.bf16.mxu0 0
        %1699 = vmatpush1.bf16.msra.mxu0 %v1661
        %1700 = vmatprep.subr.bf16.mxu0 0
        %1701 = vmatpush1.bf16.msra.mxu0 %v1660
        %1702 = vmatprep.subr.bf16.mxu0 0
        %1703 = vmatpush1.bf16.msra.mxu0 %v1659
        %1704 = vmatprep.subr.bf16.mxu0 0
        %1705 = vmatpush1.bf16.msra.mxu0 %v1658
        %1706 = vmatprep.subr.bf16.mxu0 0
        %1707 = vmatpush2.bf16.msra.mxu0 %v1673
        %1708 = vmatprep.subr.bf16.mxu0 0
        %1709 = vmatpush2.bf16.msra.mxu0 %v1672
        %1710 = vmatprep.subr.bf16.mxu0 0
        %1711 = vmatpush2.bf16.msra.mxu0 %v1671
        %1712 = vmatprep.subr.bf16.mxu0 0
        %1713 = vmatpush2.bf16.msra.mxu0 %v1670
        %1714 = vmatprep.subr.bf16.mxu0 0
        %1715 = vmatpush2.bf16.msra.mxu0 %v1669
        %1716 = vmatprep.subr.bf16.mxu0 0
        %1717 = vmatpush2.bf16.msra.mxu0 %v1668
        %1718 = vmatprep.subr.bf16.mxu0 0
        %1719 = vmatpush2.bf16.msra.mxu0 %v1667
        %1720 = vmatprep.subr.bf16.mxu0 0
        %1721 = vmatpush2.bf16.msra.mxu0 %v1666
        %1722 = vmatprep.mubr.bf16.mxu0 %v1555
        %1723 = vmatmul.mubr.bf16.gmra.mxu0 %v1554
        %v1724 = vpop.f32.mrf.mxu0
        %v1725 = vadd.f32 %v1592, %v1724
        %v1726 = vpop.f32.mrf.mxu0
        %v1727 = vpop.f32.mrf.mxu0
        %v1728 = vadd.f32 %v1592, %v1727
        %v1729 = vpop.f32.mrf.mxu0
        %1730 = vdwg.mxu0
        %v1731 = vadd.f32 %v1384, %v1725
        %v1732 = vadd.f32 %v1385, %v1728
        %1733 = vst.msk [vmem:[%s475] sm:$0xff] %vm491, %v1731
        %1734 = vst.msk [vmem:[%s475 + $0x8] sm:$0xff] %vm491, %v1732
        %s1735 = sand.u32 %s315, 1
        %s1736 = scalar_lea.sflag [#allocation5], %s1735
        %s1737 = sand.u32 %s315, 1
        %s1738 = smul.addr %s1737, 16
        %s1739 = scalar_lea.vmem [#allocation9], %s1738
        // Predicated region
        $region85: #{tpu_custom_call.1} parent=71 // pred_check
          %p1740 = pneg %p325
        $region86: #{tpu_custom_call.1} parent=71 // pred_check_branch
          %1742 = sbr.rel (%p1740) target = $region88
        $region87: #{tpu_custom_call.1} parent=71 // pred_region
          %s1744 = ssub.s32 256, 256
          %1745 = vsyncadd %s1736, %s1744
          %s1746 = smul.addr %s29, 2
          %s1747 = smul.addr %s1746, 128
          %s1748 = scalar_lea.hbm %s13, %s1747
          %s1749 = sshll.u32 %s1739, 4
          %s1750 = int_to_ptr.vmem [resolvable:$true] %s1749
          %1755 = dma.vmem_to_hbm [thread:$0]  %s1750, 256, %s1748, %s1736, 128, 128, 8
        $region88: #{tpu_custom_call.1} parent=71 // pred_fallthru
          _
      $region72: #{tpu_custom_call.1} parent=5 // pred_fallthru
        _
      %p1756 = scmp.le.s32.totalorder 2, %s24
      // Predicated region
      $region89: #{tpu_custom_call.1} parent=5 // pred_check
        %p1757 = pneg %p1756
      $region90: #{tpu_custom_call.1} parent=5 // pred_check_branch
        %1759 = sbr.rel (%p1757) target = $region92
      $region91: #{tpu_custom_call.1} parent=5 // pred_region
        %s1760 = ssub.s32 %s24, 2
        // Predicated region
        $region93: #{tpu_custom_call.1} parent=91 // pred_check
          %p1761 = pneg %p331
        $region94: #{tpu_custom_call.1} parent=91 // pred_check_branch
          %1763 = sbr.rel (%p1761) target = $region96
        $region95: #{tpu_custom_call.1} parent=91 // pred_region
          %s1764 = sand.u32 %s316, 1
          %s1765 = scalar_lea.sflag [#allocation5], %s1764
          %s1766 = sand.u32 %s316, 1
          %s1767 = smul.addr %s1766, 16
          %s1768 = scalar_lea.vmem [#allocation9], %s1767
          %1769 = dma.done %s1765, 256
        $region96: #{tpu_custom_call.1} parent=91 // pred_fallthru
          _
      $region92: #{tpu_custom_call.1} parent=5 // pred_fallthru
        _
    $region6: #{tpu_custom_call.1} parent=1 // loop_footer
      %s28 = sadd.s32 1, %s24
    $region7: #{tpu_custom_call.1} parent=1 // loop_footer_branch
      %23 = sbr.rel target = $region3
    $region8: #{tpu_custom_call.1} parent=1 // loop_exit
      _
    %1770 = vsyncpa [#allocation4], 1
    %s1771 = scalar_lea.sflag [#allocation4], 1
    %1772 = vsyncpa %s1771, 1
    %1773 = vsyncpa [#allocation7], 1
    %1774 = vsyncpa [#allocation5], 1
    %s1775 = scalar_lea.sflag [#allocation5], 1
    %1776 = vsyncpa %s1775, 1

</llo_original>
